<compile_context>
chip_gen: v7x
topology: tpu7x:2x2x1
jax: 0.10.0
libtpu: 0.0.40
codegen_flags: <defaults>
</compile_context>

<pallas_src>
import functools
import math

import numpy as np
import jax
import jax.numpy as jnp
from jax import lax
from jax.experimental import pallas as pl
from jax.experimental.pallas import tpu as pltpu


# ---------------------------------------------------------------------------
# Fused Pallas kernel: V projection + folded-QK scores + softmax + ctx + out proj + residual
# ---------------------------------------------------------------------------

def _fused_shortener_kernel(x_ref, qk_ref, wv_ref, bv_ref, wo_ref, qbias_ref,
                            out_ref, w_ref, *, num_heads):
    # x_ref:     (Bt, S, E)    bf16 block of batch elements
    # qk_ref:    (H*L, E)      bf16: per-head (scaled q-proj) @ Wk_h rows, VMEM-resident
    # wv_ref:    (E, E)        bf16 value-projection weight (pre-transposed), resident
    # bv_ref:    (1, E)        f32 value-projection bias, resident
    # wo_ref:    (E, E)        f32 output-projection weight (pre-transposed), resident
    # qbias_ref: (L, E)        f32 (query residual + output-projection bias), resident
    # out_ref:   (Bt, L, E)
    # w_ref:     (Bt, H, L, S) f32 attention weights
    Bt, S, E = x_ref.shape
    H = num_heads
    L = qbias_ref.shape[0]
    D = E // H

    x_blk = x_ref[...]                               # (Bt, S, E) bf16
    x2 = x_blk.reshape(Bt * S, E)                    # merge batch into rows (sublane concat)

    # Value projection for the whole batch block: one MXU matmul, f32 accumulation.
    v = jnp.dot(x2, wv_ref[...], preferred_element_type=jnp.float32) + bv_ref[...]
    v = v.reshape(Bt, S, E)                          # (Bt, S, E) f32

    for b in range(Bt):                              # small static batch tile -> unrolled
        xb = x_blk[b]                                # (S, E) bf16

        # All-head scores in ONE dot: (H*L, E) · (S, E)^T -> (H*L, S).
        # 1/sqrt(D), q-projection (weight+bias) and Wk are pre-folded into qk_ref;
        # the key bias is dropped (softmax-invariant).
        s = lax.dot_general(qk_ref[...], xb, (((1,), (1,)), ((), ())),
                            preferred_element_type=jnp.float32)
        s = s.reshape(H, L, S)                       # free split of the sublane-major dim

        # Softmax over S, all f32 elementwise (fast path on every generation incl. v5e).
        m = jnp.max(s, axis=-1, keepdims=True)
        p = jnp.exp(s - m)
        denom = jnp.sum(p, axis=-1, keepdims=True)
        p = p * pl.reciprocal(denom, approx=True)    # (H, L, S)

        # Single store of all heads' attention weights for this sample.
        w_ref[b] = p.astype(w_ref.dtype)

        # Context per head, assembled directly in merged (L, E) layout (f32, tiny).
        vb = v[b]                                    # (S, E) f32
        ctx = jnp.concatenate(
            [jnp.dot(p[h], vb[:, h * D:(h + 1) * D],
                     preferred_element_type=jnp.float32) for h in range(H)],
            axis=-1)                                 # (L, E)

        # Output projection + (query residual + out-proj bias).
        out = jnp.dot(ctx, wo_ref[...], preferred_element_type=jnp.float32) + qbias_ref[...]
        out_ref[b] = out.astype(out_ref.dtype)


# ---------------------------------------------------------------------------
# One-time parameter massaging (all batch-invariant math hoisted out of the kernel)
# ---------------------------------------------------------------------------

def prepare_kernel_params(params, num_heads):
    query = params["query"]                          # (1, L, E)
    L, E = query.shape[1], query.shape[2]
    H = num_heads
    D = E // H
    scale = 1.0 / math.sqrt(D)
    hp = jax.lax.Precision.HIGHEST

    in_w = params["in_proj_weight"].astype(jnp.float32)   # (3E, E), torch: y = x @ W^T + b
    in_b = params["in_proj_bias"].astype(jnp.float32)     # (3E,)
    wq, wk, wv = in_w[:E], in_w[E:2 * E], in_w[2 * E:]
    bq, bv = in_b[:E], in_b[2 * E:]

    q0 = query[0].astype(jnp.float32)                      # (L, E)
    qs = (jnp.dot(q0, wq.T, precision=hp) + bq) * scale    # scaled, biased query projection

    # Fold the query projection into the key projection:  scores_h = qs_h @ Wk_h @ x^T
    # (key bias dropped: it adds a per-row constant that softmax cancels exactly).
    qk_rows = jnp.einsum("lhd,hde->hle",
                         qs.reshape(L, H, D), wk.reshape(H, D, E),
                         precision=hp).reshape(H * L, E)

    return {
        "qk_rows": qk_rows.astype(jnp.bfloat16),                        # (H*L, E)
        "wv_t": wv.T.astype(jnp.bfloat16),                              # (E, E)
        "bv": bv.reshape(1, E).astype(jnp.float32),                     # (1, E)
        "wo_t": params["out_proj_weight"].T.astype(jnp.float32),        # (E, E)
        "qbias": (q0 + params["out_proj_bias"]).astype(jnp.float32),    # (L, E)
    }


def _pick_batch_tile(batch, max_bt=8):
    """Largest batch tile (<= max_bt) dividing B while keeping >= 2 grid steps
    (so the 'parallel' grid axis can feed both v7x TensorCores / pipeline DMAs)."""
    best = 1
    for bt in range(1, min(max_bt, batch) + 1):
        if batch % bt == 0 and batch // bt >= 2:
            best = bt
    return best


# ---------------------------------------------------------------------------
# Wrapper
# ---------------------------------------------------------------------------

def mha_sequence_shortener(x, kparams, num_heads, block_b=None):
    """Forward pass of MHASequenceShortener as a single fused pallas_call.  x: (B, S, E)."""
    B, S, E = x.shape
    H = num_heads
    L = kparams["qbias"].shape[0]
    if block_b is None:
        block_b = _pick_batch_tile(B)
    assert B % block_b == 0

    x_bf = x.astype(jnp.bfloat16)                    # bf16 MXU operand; accum stays f32
    kernel = functools.partial(_fused_shortener_kernel, num_heads=H)

    out, attn_w = pl.pallas_call(
        kernel,
        out_shape=(
            jax.ShapeDtypeStruct((B, L, E), x.dtype),
            jax.ShapeDtypeStruct((B, H, L, S), jnp.float32),
        ),
        grid_spec=pltpu.PrefetchScalarGridSpec(
            num_scalar_prefetch=0,
            grid=(B // block_b,),
            in_specs=[
                pl.BlockSpec((block_b, S, E), lambda i: (i, 0, 0)),     # x block
                pl.BlockSpec((H * L, E), lambda i: (0, 0)),             # qk_rows (resident)
                pl.BlockSpec((E, E), lambda i: (0, 0)),                 # wv_t    (resident)
                pl.BlockSpec((1, E), lambda i: (0, 0)),                 # bv      (resident)
                pl.BlockSpec((E, E), lambda i: (0, 0)),                 # wo_t    (resident)
                pl.BlockSpec((L, E), lambda i: (0, 0)),                 # qbias   (resident)
            ],
            out_specs=[
                pl.BlockSpec((block_b, L, E), lambda i: (i, 0, 0)),
                pl.BlockSpec((block_b, H, L, S), lambda i: (i, 0, 0, 0)),
            ],
        ),
        compiler_params=pltpu.CompilerParams(
            dimension_semantics=("parallel",),       # batch-block axis -> both v7x TCs
        ),
    )(x_bf, kparams["qk_rows"], kparams["wv_t"], kparams["bv"],
      kparams["wo_t"], kparams["qbias"])

    return out, (attn_w,)


# ---------------------------------------------------------------------------
# Pure-JAX reference (faithful f32 re-implementation of the torch module)
# ---------------------------------------------------------------------------

def reference_forward(x, params, num_heads):
    B, S, E = x.shape
    query = params["query"]
    L = query.shape[1]
    H, D = num_heads, E // num_heads
    in_w, in_b = params["in_proj_weight"], params["in_proj_bias"]
    hp = jax.lax.Precision.HIGHEST

    q = jnp.einsum("ble,fe->blf", query, in_w[:E], precision=hp) + in_b[:E]
    k = jnp.einsum("bse,fe->bsf", x, in_w[E:2 * E], precision=hp) + in_b[E:2 * E]
    v = jnp.einsum("bse,fe->bsf", x, in_w[2 * E:], precision=hp) + in_b[2 * E:]

    qh = jnp.broadcast_to(q.reshape(1, L, H, D).transpose(0, 2, 1, 3), (B, H, L, D))
    kh = k.reshape(B, S, H, D).transpose(0, 2, 1, 3)
    vh = v.reshape(B, S, H, D).transpose(0, 2, 1, 3)

    s = jnp.einsum("bhld,bhsd->bhls", qh, kh, precision=hp) / math.sqrt(D)
    w = jax.nn.softmax(s, axis=-1)
    ctx = jnp.einsum("bhls,bhsd->bhld", w, vh, precision=hp)
    ctx = ctx.transpose(0, 2, 1, 3).reshape(B, L, E)
    out = jnp.einsum("ble,fe->blf", ctx, params["out_proj_weight"], precision=hp) \
        + params["out_proj_bias"] + query
    return out, w


# ---------------------------------------------------------------------------
# Main
# ---------------------------------------------------------------------------

if __name__ == "__main__":
    B, S, E = 4, 16, 32       # batch, source seq len, embed_dim
    H = 4                     # num_heads
    TARGET_LEN = 8            # target (shortened) seq len

    key = jax.random.PRNGKey(0)
    kx, kq, kw, kb, kow, kob = jax.random.split(key, 6)

    x = jax.random.normal(kx, (B, S, E), dtype=jnp.float32)

    params = {
        # nn.Parameter(trunc_normal_(empty(1, target_len, embed_dim), 0.0, 0.2))
        "query": 0.2 * jax.random.truncated_normal(kq, -2.0, 2.0, (1, TARGET_LEN, E), jnp.float32),
        # nn.MultiheadAttention parameters (deterministic synthetic init)
        "in_proj_weight": (1.0 / math.sqrt(E)) * jax.random.normal(kw, (3 * E, E), jnp.float32),
        "in_proj_bias": 0.01 * jax.random.normal(kb, (3 * E,), jnp.float32),
        "out_proj_weight": (1.0 / math.sqrt(E)) * jax.random.normal(kow, (E, E), jnp.float32),
        "out_proj_bias": 0.01 * jax.random.normal(kob, (E,), jnp.float32),
    }

    kparams = prepare_kernel_params(params, num_heads=H)

    out, (attn_w,) = mha_sequence_shortener(x, kparams, num_heads=H)
    out = jax.block_until_ready(out)
    attn_w = jax.block_until_ready(attn_w)

    ref_out, ref_w = reference_forward(x, params, num_heads=H)

    assert out.shape == (B, TARGET_LEN, E)
    assert attn_w.shape == (B, H, TARGET_LEN, S)
    # Output tolerance slightly looser than rev 1: x / Wv / folded-QK MXU operands are bf16
    # (f32 accumulation); attention weights stay near-f32-exact.
    np.testing.assert_allclose(np.asarray(out), np.asarray(ref_out), rtol=2e-2, atol=2e-2)
    np.testing.assert_allclose(np.asarray(attn_w), np.asarray(ref_w), rtol=1e-2, atol=1e-2)

    print("KERNEL_OK")
</pallas_src>

<mosaic_0001>
module attributes {stable_mosaic.version = 11 : i64} {
  func.func @_fused_shortener_kernel(%arg0: i32, %arg1: memref<2x16x32xbf16, #tpu.memory_space<vmem>>, %arg2: memref<32x32xbf16, #tpu.memory_space<vmem>>, %arg3: memref<32x32xbf16, #tpu.memory_space<vmem>>, %arg4: memref<1x32xf32, #tpu.memory_space<vmem>>, %arg5: memref<32x32xf32, #tpu.memory_space<vmem>>, %arg6: memref<8x32xf32, #tpu.memory_space<vmem>>, %arg7: memref<2x8x32xf32, #tpu.memory_space<vmem>>, %arg8: memref<2x4x8x16xf32, #tpu.memory_space<vmem>>) attributes {dimension_semantics = [#tpu.dimension_semantics<parallel>], iteration_bounds = array<i64: 2>, scalar_prefetch = 0 : i64, scratch_operands = 0 : i64, tpu.core_type = #tpu.core_type<tc>, window_params = [{transform_indices = @transform_0, window_bounds = array<i64: 2, 16, 32>}, {pipeline_mode = #tpu.pipeline_mode<synchronous>, transform_indices = @transform_1, window_bounds = array<i64: 32, 32>}, {pipeline_mode = #tpu.pipeline_mode<synchronous>, transform_indices = @transform_2, window_bounds = array<i64: 32, 32>}, {pipeline_mode = #tpu.pipeline_mode<synchronous>, transform_indices = @transform_3, window_bounds = array<i64: 1, 32>}, {pipeline_mode = #tpu.pipeline_mode<synchronous>, transform_indices = @transform_4, window_bounds = array<i64: 32, 32>}, {pipeline_mode = #tpu.pipeline_mode<synchronous>, transform_indices = @transform_5, window_bounds = array<i64: 8, 32>}, {transform_indices = @transform_6, window_bounds = array<i64: 2, 8, 32>}, {transform_indices = @transform_7, window_bounds = array<i64: 2, 4, 8, 16>}]} {
    %c0 = arith.constant 0 : index
    %c0_0 = arith.constant 0 : index
    %c0_1 = arith.constant 0 : index
    %0 = vector.load %arg1[%c0, %c0_0, %c0_1] : memref<2x16x32xbf16, #tpu.memory_space<vmem>>, vector<2x16x32xbf16>
    %1 = vector.shape_cast %0 : vector<2x16x32xbf16> to vector<32x32xbf16>
    %c0_2 = arith.constant 0 : index
    %c0_3 = arith.constant 0 : index
    %2 = vector.load %arg3[%c0_2, %c0_3] : memref<32x32xbf16, #tpu.memory_space<vmem>>, vector<32x32xbf16>
    %cst = arith.constant dense<0.000000e+00> : vector<32x32xf32>
    %3 = tpu.matmul %1, %2, %cst {dimension_numbers = #tpu.dot_dimension_numbers<[1], [0], [0], [1], [0, 0, 1, 1], [], []>} : vector<32x32xbf16>, vector<32x32xbf16>, vector<32x32xf32> -> vector<32x32xf32>
    %c0_4 = arith.constant 0 : index
    %c0_5 = arith.constant 0 : index
    %4 = vector.load %arg4[%c0_4, %c0_5] : memref<1x32xf32, #tpu.memory_space<vmem>>, vector<1x32xf32>
    %5 = vector.broadcast %4 : vector<1x32xf32> to vector<32x32xf32>
    %6 = arith.addf %3, %5 : vector<32x32xf32>
    %7 = vector.shape_cast %6 : vector<32x32xf32> to vector<2x16x32xf32>
    %8 = vector.extract_strided_slice %0 {offsets = [0, 0, 0], sizes = [1, 16, 32], strides = [1, 1, 1]} : vector<2x16x32xbf16> to vector<1x16x32xbf16>
    %9 = vector.shape_cast %8 : vector<1x16x32xbf16> to vector<16x32xbf16>
    %c0_6 = arith.constant 0 : index
    %c0_7 = arith.constant 0 : index
    %10 = vector.load %arg2[%c0_6, %c0_7] : memref<32x32xbf16, #tpu.memory_space<vmem>>, vector<32x32xbf16>
    %cst_8 = arith.constant dense<0.000000e+00> : vector<32x16xf32>
    %11 = tpu.matmul %10, %9, %cst_8 {dimension_numbers = #tpu.dot_dimension_numbers<[1], [1], [0], [0], [0, 0, 1, 0], [], []>} : vector<32x32xbf16>, vector<16x32xbf16>, vector<32x16xf32> -> vector<32x16xf32>
    %12 = vector.shape_cast %11 : vector<32x16xf32> to vector<4x8x16xf32>
    %cst_9 = arith.constant dense<0xFF800000> : vector<4x8xf32>
    %13 = vector.multi_reduction <maximumf>, %12, %cst_9 [2] : vector<4x8x16xf32> to vector<4x8xf32>
    %14 = vector.shape_cast %13 : vector<4x8xf32> to vector<4x8x1xf32>
    %15 = vector.broadcast %14 : vector<4x8x1xf32> to vector<4x8x16xf32>
    %16 = arith.subf %12, %15 : vector<4x8x16xf32>
    %17 = math.exp %16 : vector<4x8x16xf32>
    %cst_10 = arith.constant dense<0.000000e+00> : vector<4x8xf32>
    %18 = vector.multi_reduction <add>, %17, %cst_10 [2] : vector<4x8x16xf32> to vector<4x8xf32>
    %19 = vector.shape_cast %18 : vector<4x8xf32> to vector<4x8x1xf32>
    %20 = tpu.reciprocal %19 {approx = true} : vector<4x8x1xf32> -> vector<4x8x1xf32>
    %21 = vector.broadcast %20 : vector<4x8x1xf32> to vector<4x8x16xf32>
    %22 = arith.mulf %17, %21 : vector<4x8x16xf32>
    %c0_11 = arith.constant 0 : index
    %c0_12 = arith.constant 0 : index
    %c0_13 = arith.constant 0 : index
    %c0_14 = arith.constant 0 : index
    %23 = vector.load %arg8[%c0_11, %c0_12, %c0_13, %c0_14] : memref<2x4x8x16xf32, #tpu.memory_space<vmem>>, vector<1x4x8x16xf32>
    %24 = vector.shape_cast %23 : vector<1x4x8x16xf32> to vector<4x8x16xf32>
    %25 = vector.shape_cast %22 : vector<4x8x16xf32> to vector<1x4x8x16xf32>
    tpu.vector_store %arg8[%c0_11, %c0_12, %c0_13, %c0_14], %25 {strides = array<i32>} : memref<2x4x8x16xf32, #tpu.memory_space<vmem>>, vector<1x4x8x16xf32>,
    %26 = vector.extract_strided_slice %7 {offsets = [0, 0, 0], sizes = [1, 16, 32], strides = [1, 1, 1]} : vector<2x16x32xf32> to vector<1x16x32xf32>
    %27 = vector.shape_cast %26 : vector<1x16x32xf32> to vector<16x32xf32>
    %28 = vector.extract_strided_slice %22 {offsets = [0, 0, 0], sizes = [1, 8, 16], strides = [1, 1, 1]} : vector<4x8x16xf32> to vector<1x8x16xf32>
    %29 = vector.shape_cast %28 : vector<1x8x16xf32> to vector<8x16xf32>
    %30 = vector.extract_strided_slice %27 {offsets = [0, 0], sizes = [16, 8], strides = [1, 1]} : vector<16x32xf32> to vector<16x8xf32>
    %cst_15 = arith.constant dense<0.000000e+00> : vector<8x8xf32>
    %31 = tpu.matmul %29, %30, %cst_15 {dimension_numbers = #tpu.dot_dimension_numbers<[1], [0], [0], [1], [0, 0, 1, 1], [], []>} : vector<8x16xf32>, vector<16x8xf32>, vector<8x8xf32> -> vector<8x8xf32>
    %32 = vector.extract_strided_slice %22 {offsets = [1, 0, 0], sizes = [1, 8, 16], strides = [1, 1, 1]} : vector<4x8x16xf32> to vector<1x8x16xf32>
    %33 = vector.shape_cast %32 : vector<1x8x16xf32> to vector<8x16xf32>
    %34 = vector.extract_strided_slice %27 {offsets = [0, 8], sizes = [16, 8], strides = [1, 1]} : vector<16x32xf32> to vector<16x8xf32>
    %cst_16 = arith.constant dense<0.000000e+00> : vector<8x8xf32>
    %35 = tpu.matmul %33, %34, %cst_16 {dimension_numbers = #tpu.dot_dimension_numbers<[1], [0], [0], [1], [0, 0, 1, 1], [], []>} : vector<8x16xf32>, vector<16x8xf32>, vector<8x8xf32> -> vector<8x8xf32>
    %36 = vector.extract_strided_slice %22 {offsets = [2, 0, 0], sizes = [1, 8, 16], strides = [1, 1, 1]} : vector<4x8x16xf32> to vector<1x8x16xf32>
    %37 = vector.shape_cast %36 : vector<1x8x16xf32> to vector<8x16xf32>
    %38 = vector.extract_strided_slice %27 {offsets = [0, 16], sizes = [16, 8], strides = [1, 1]} : vector<16x32xf32> to vector<16x8xf32>
    %cst_17 = arith.constant dense<0.000000e+00> : vector<8x8xf32>
    %39 = tpu.matmul %37, %38, %cst_17 {dimension_numbers = #tpu.dot_dimension_numbers<[1], [0], [0], [1], [0, 0, 1, 1], [], []>} : vector<8x16xf32>, vector<16x8xf32>, vector<8x8xf32> -> vector<8x8xf32>
    %40 = vector.extract_strided_slice %22 {offsets = [3, 0, 0], sizes = [1, 8, 16], strides = [1, 1, 1]} : vector<4x8x16xf32> to vector<1x8x16xf32>
    %41 = vector.shape_cast %40 : vector<1x8x16xf32> to vector<8x16xf32>
    %42 = vector.extract_strided_slice %27 {offsets = [0, 24], sizes = [16, 8], strides = [1, 1]} : vector<16x32xf32> to vector<16x8xf32>
    %cst_18 = arith.constant dense<0.000000e+00> : vector<8x8xf32>
    %43 = tpu.matmul %41, %42, %cst_18 {dimension_numbers = #tpu.dot_dimension_numbers<[1], [0], [0], [1], [0, 0, 1, 1], [], []>} : vector<8x16xf32>, vector<16x8xf32>, vector<8x8xf32> -> vector<8x8xf32>
    %44 = tpu.concatenate %31, %35, %39, %43 in 1 : vector<8x8xf32>, vector<8x8xf32>, vector<8x8xf32>, vector<8x8xf32> -> vector<8x32xf32>
    %c0_19 = arith.constant 0 : index
    %c0_20 = arith.constant 0 : index
    %45 = vector.load %arg5[%c0_19, %c0_20] : memref<32x32xf32, #tpu.memory_space<vmem>>, vector<32x32xf32>
    %cst_21 = arith.constant dense<0.000000e+00> : vector<8x32xf32>
    %46 = tpu.matmul %44, %45, %cst_21 {dimension_numbers = #tpu.dot_dimension_numbers<[1], [0], [0], [1], [0, 0, 1, 1], [], []>} : vector<8x32xf32>, vector<32x32xf32>, vector<8x32xf32> -> vector<8x32xf32>
    %c0_22 = arith.constant 0 : index
    %c0_23 = arith.constant 0 : index
    %47 = vector.load %arg6[%c0_22, %c0_23] : memref<8x32xf32, #tpu.memory_space<vmem>>, vector<8x32xf32>
    %48 = arith.addf %46, %47 : vector<8x32xf32>
    %c0_24 = arith.constant 0 : index
    %c0_25 = arith.constant 0 : index
    %c0_26 = arith.constant 0 : index
    %49 = vector.load %arg7[%c0_24, %c0_25, %c0_26] : memref<2x8x32xf32, #tpu.memory_space<vmem>>, vector<1x8x32xf32>
    %50 = vector.shape_cast %49 : vector<1x8x32xf32> to vector<8x32xf32>
    %51 = vector.shape_cast %48 : vector<8x32xf32> to vector<1x8x32xf32>
    tpu.vector_store %arg7[%c0_24, %c0_25, %c0_26], %51 {strides = array<i32>} : memref<2x8x32xf32, #tpu.memory_space<vmem>>, vector<1x8x32xf32>,
    %52 = vector.extract_strided_slice %0 {offsets = [1, 0, 0], sizes = [1, 16, 32], strides = [1, 1, 1]} : vector<2x16x32xbf16> to vector<1x16x32xbf16>
    %53 = vector.shape_cast %52 : vector<1x16x32xbf16> to vector<16x32xbf16>
    %c0_27 = arith.constant 0 : index
    %c0_28 = arith.constant 0 : index
    %54 = vector.load %arg2[%c0_27, %c0_28] : memref<32x32xbf16, #tpu.memory_space<vmem>>, vector<32x32xbf16>
    %cst_29 = arith.constant dense<0.000000e+00> : vector<32x16xf32>
    %55 = tpu.matmul %54, %53, %cst_29 {dimension_numbers = #tpu.dot_dimension_numbers<[1], [1], [0], [0], [0, 0, 1, 0], [], []>} : vector<32x32xbf16>, vector<16x32xbf16>, vector<32x16xf32> -> vector<32x16xf32>
    %56 = vector.shape_cast %55 : vector<32x16xf32> to vector<4x8x16xf32>
    %cst_30 = arith.constant dense<0xFF800000> : vector<4x8xf32>
    %57 = vector.multi_reduction <maximumf>, %56, %cst_30 [2] : vector<4x8x16xf32> to vector<4x8xf32>
    %58 = vector.shape_cast %57 : vector<4x8xf32> to vector<4x8x1xf32>
    %59 = vector.broadcast %58 : vector<4x8x1xf32> to vector<4x8x16xf32>
    %60 = arith.subf %56, %59 : vector<4x8x16xf32>
    %61 = math.exp %60 : vector<4x8x16xf32>
    %cst_31 = arith.constant dense<0.000000e+00> : vector<4x8xf32>
    %62 = vector.multi_reduction <add>, %61, %cst_31 [2] : vector<4x8x16xf32> to vector<4x8xf32>
    %63 = vector.shape_cast %62 : vector<4x8xf32> to vector<4x8x1xf32>
    %64 = tpu.reciprocal %63 {approx = true} : vector<4x8x1xf32> -> vector<4x8x1xf32>
    %65 = vector.broadcast %64 : vector<4x8x1xf32> to vector<4x8x16xf32>
    %66 = arith.mulf %61, %65 : vector<4x8x16xf32>
    %c1 = arith.constant 1 : index
    %c0_32 = arith.constant 0 : index
    %c0_33 = arith.constant 0 : index
    %c0_34 = arith.constant 0 : index
    %67 = vector.load %arg8[%c1, %c0_32, %c0_33, %c0_34] : memref<2x4x8x16xf32, #tpu.memory_space<vmem>>, vector<1x4x8x16xf32>
    %68 = vector.shape_cast %67 : vector<1x4x8x16xf32> to vector<4x8x16xf32>
    %69 = vector.shape_cast %66 : vector<4x8x16xf32> to vector<1x4x8x16xf32>
    tpu.vector_store %arg8[%c1, %c0_32, %c0_33, %c0_34], %69 {strides = array<i32>} : memref<2x4x8x16xf32, #tpu.memory_space<vmem>>, vector<1x4x8x16xf32>,
    %70 = vector.extract_strided_slice %7 {offsets = [1, 0, 0], sizes = [1, 16, 32], strides = [1, 1, 1]} : vector<2x16x32xf32> to vector<1x16x32xf32>
    %71 = vector.shape_cast %70 : vector<1x16x32xf32> to vector<16x32xf32>
    %72 = vector.extract_strided_slice %66 {offsets = [0, 0, 0], sizes = [1, 8, 16], strides = [1, 1, 1]} : vector<4x8x16xf32> to vector<1x8x16xf32>
    %73 = vector.shape_cast %72 : vector<1x8x16xf32> to vector<8x16xf32>
    %74 = vector.extract_strided_slice %71 {offsets = [0, 0], sizes = [16, 8], strides = [1, 1]} : vector<16x32xf32> to vector<16x8xf32>
    %cst_35 = arith.constant dense<0.000000e+00> : vector<8x8xf32>
    %75 = tpu.matmul %73, %74, %cst_35 {dimension_numbers = #tpu.dot_dimension_numbers<[1], [0], [0], [1], [0, 0, 1, 1], [], []>} : vector<8x16xf32>, vector<16x8xf32>, vector<8x8xf32> -> vector<8x8xf32>
    %76 = vector.extract_strided_slice %66 {offsets = [1, 0, 0], sizes = [1, 8, 16], strides = [1, 1, 1]} : vector<4x8x16xf32> to vector<1x8x16xf32>
    %77 = vector.shape_cast %76 : vector<1x8x16xf32> to vector<8x16xf32>
    %78 = vector.extract_strided_slice %71 {offsets = [0, 8], sizes = [16, 8], strides = [1, 1]} : vector<16x32xf32> to vector<16x8xf32>
    %cst_36 = arith.constant dense<0.000000e+00> : vector<8x8xf32>
    %79 = tpu.matmul %77, %78, %cst_36 {dimension_numbers = #tpu.dot_dimension_numbers<[1], [0], [0], [1], [0, 0, 1, 1], [], []>} : vector<8x16xf32>, vector<16x8xf32>, vector<8x8xf32> -> vector<8x8xf32>
    %80 = vector.extract_strided_slice %66 {offsets = [2, 0, 0], sizes = [1, 8, 16], strides = [1, 1, 1]} : vector<4x8x16xf32> to vector<1x8x16xf32>
    %81 = vector.shape_cast %80 : vector<1x8x16xf32> to vector<8x16xf32>
    %82 = vector.extract_strided_slice %71 {offsets = [0, 16], sizes = [16, 8], strides = [1, 1]} : vector<16x32xf32> to vector<16x8xf32>
    %cst_37 = arith.constant dense<0.000000e+00> : vector<8x8xf32>
    %83 = tpu.matmul %81, %82, %cst_37 {dimension_numbers = #tpu.dot_dimension_numbers<[1], [0], [0], [1], [0, 0, 1, 1], [], []>} : vector<8x16xf32>, vector<16x8xf32>, vector<8x8xf32> -> vector<8x8xf32>
    %84 = vector.extract_strided_slice %66 {offsets = [3, 0, 0], sizes = [1, 8, 16], strides = [1, 1, 1]} : vector<4x8x16xf32> to vector<1x8x16xf32>
    %85 = vector.shape_cast %84 : vector<1x8x16xf32> to vector<8x16xf32>
    %86 = vector.extract_strided_slice %71 {offsets = [0, 24], sizes = [16, 8], strides = [1, 1]} : vector<16x32xf32> to vector<16x8xf32>
    %cst_38 = arith.constant dense<0.000000e+00> : vector<8x8xf32>
    %87 = tpu.matmul %85, %86, %cst_38 {dimension_numbers = #tpu.dot_dimension_numbers<[1], [0], [0], [1], [0, 0, 1, 1], [], []>} : vector<8x16xf32>, vector<16x8xf32>, vector<8x8xf32> -> vector<8x8xf32>
    %88 = tpu.concatenate %75, %79, %83, %87 in 1 : vector<8x8xf32>, vector<8x8xf32>, vector<8x8xf32>, vector<8x8xf32> -> vector<8x32xf32>
    %c0_39 = arith.constant 0 : index
    %c0_40 = arith.constant 0 : index
    %89 = vector.load %arg5[%c0_39, %c0_40] : memref<32x32xf32, #tpu.memory_space<vmem>>, vector<32x32xf32>
    %cst_41 = arith.constant dense<0.000000e+00> : vector<8x32xf32>
    %90 = tpu.matmul %88, %89, %cst_41 {dimension_numbers = #tpu.dot_dimension_numbers<[1], [0], [0], [1], [0, 0, 1, 1], [], []>} : vector<8x32xf32>, vector<32x32xf32>, vector<8x32xf32> -> vector<8x32xf32>
    %c0_42 = arith.constant 0 : index
    %c0_43 = arith.constant 0 : index
    %91 = vector.load %arg6[%c0_42, %c0_43] : memref<8x32xf32, #tpu.memory_space<vmem>>, vector<8x32xf32>
    %92 = arith.addf %90, %91 : vector<8x32xf32>
    %c1_44 = arith.constant 1 : index
    %c0_45 = arith.constant 0 : index
    %c0_46 = arith.constant 0 : index
    %93 = vector.load %arg7[%c1_44, %c0_45, %c0_46] : memref<2x8x32xf32, #tpu.memory_space<vmem>>, vector<1x8x32xf32>
    %94 = vector.shape_cast %93 : vector<1x8x32xf32> to vector<8x32xf32>
    %95 = vector.shape_cast %92 : vector<8x32xf32> to vector<1x8x32xf32>
    tpu.vector_store %arg7[%c1_44, %c0_45, %c0_46], %95 {strides = array<i32>} : memref<2x8x32xf32, #tpu.memory_space<vmem>>, vector<1x8x32xf32>,
    return
  }
  func.func @transform_0(%arg0: i32) -> (i32, i32, i32) {
    %c0_i32 = arith.constant 0 : i32
    %c0_i32_0 = arith.constant 0 : i32
    %c0_i32_1 = arith.constant 0 : i32
    return %arg0, %c0_i32, %c0_i32_0 : i32, i32, i32
  }
  func.func @transform_1(%arg0: i32) -> (i32, i32) {
    %c0_i32 = arith.constant 0 : i32
    %c0_i32_0 = arith.constant 0 : i32
    %c0_i32_1 = arith.constant 0 : i32
    return %c0_i32, %c0_i32_0 : i32, i32
  }
  func.func @transform_2(%arg0: i32) -> (i32, i32) {
    %c0_i32 = arith.constant 0 : i32
    %c0_i32_0 = arith.constant 0 : i32
    %c0_i32_1 = arith.constant 0 : i32
    return %c0_i32, %c0_i32_0 : i32, i32
  }
  func.func @transform_3(%arg0: i32) -> (i32, i32) {
    %c0_i32 = arith.constant 0 : i32
    %c0_i32_0 = arith.constant 0 : i32
    %c0_i32_1 = arith.constant 0 : i32
    return %c0_i32, %c0_i32_0 : i32, i32
  }
  func.func @transform_4(%arg0: i32) -> (i32, i32) {
    %c0_i32 = arith.constant 0 : i32
    %c0_i32_0 = arith.constant 0 : i32
    %c0_i32_1 = arith.constant 0 : i32
    return %c0_i32, %c0_i32_0 : i32, i32
  }
  func.func @transform_5(%arg0: i32) -> (i32, i32) {
    %c0_i32 = arith.constant 0 : i32
    %c0_i32_0 = arith.constant 0 : i32
    %c0_i32_1 = arith.constant 0 : i32
    return %c0_i32, %c0_i32_0 : i32, i32
  }
  func.func @transform_6(%arg0: i32) -> (i32, i32, i32) {
    %c0_i32 = arith.constant 0 : i32
    %c0_i32_0 = arith.constant 0 : i32
    %c0_i32_1 = arith.constant 0 : i32
    return %arg0, %c0_i32, %c0_i32_0 : i32, i32, i32
  }
  func.func @transform_7(%arg0: i32) -> (i32, i32, i32, i32) {
    %c0_i32 = arith.constant 0 : i32
    %c0_i32_0 = arith.constant 0 : i32
    %c0_i32_1 = arith.constant 0 : i32
    %c0_i32_2 = arith.constant 0 : i32
    return %arg0, %c0_i32, %c0_i32_0, %c0_i32_1 : i32, i32, i32, i32
  }
}

</mosaic_0001>

<llo_original>
// kernel: tpu_custom_call.1
$region0: #{tpu_custom_call.1}
  #allocation0 [shape = 'u32[]', space=smem, size = 0x4, offset = 0x4, fixed_abs, tag = 'smem constant byte address 0x4 - core index']
  #allocation1 [shape = 'u32[144,128]{1,0:T(1,128)}', space=vmem, size = 0x12000, scoped, tag = 'internal scratch']
  %s0 = inlined_call_operand.hbm [shape: bf16[4,16,32], index: 0, kind: input, shape index: {}]
  %s1 = inlined_call_operand.hbm [shape: bf16[32,32], index: 1, kind: input, shape index: {}]
  %s2 = inlined_call_operand.hbm [shape: bf16[32,32], index: 2, kind: input, shape index: {}]
  %s3 = inlined_call_operand.vmem [shape: f32[1,32], index: 3, kind: input, shape index: {}]
  %s4 = inlined_call_operand.hbm [shape: f32[32,32], index: 4, kind: input, shape index: {}]
  %s5 = inlined_call_operand.vmem [shape: f32[8,32], index: 5, kind: input, shape index: {}]
  %s6 = inlined_call_operand.hbm [shape: f32[4,8,32], index: 6, kind: output, shape index: {0}]
  %s7 = inlined_call_operand.hbm [shape: f32[4,4,8,16], index: 7, kind: output, shape index: {1}]
  %8 = xla_tuple %s6, %s7
  %s9 = sld [smem:[#allocation0]]
  $region81: #{tpu_custom_call.1} parent=0
    _
  %s11 = ssub.s32 1, %s9
  %s12 = scalar_select 0, %s11, %s9
  $region1: #{tpu_custom_call.1} parent=0
    #allocation2 [shape = 'u8[16384]{0}', space=vmem, size = 0x4000, scoped, tag = 'input window, operand 0']
    #allocation3 [shape = 's32[2]{0}', space=sflag, size = 0x8, scoped, tag = 'scoped memory for tpu_custom_call.1']
    #allocation4 [shape = 's32[2]{0}', space=sflag, size = 0x8, scoped, tag = 'scoped memory for tpu_custom_call.1']
    #allocation5 [shape = 'u8[8192]{0}', space=vmem, size = 0x2000, scoped, tag = 'input window, operand 1, single buffered']
    #allocation6 [shape = 's32[1]{0}', space=sflag, size = 0x4, scoped, tag = 'scoped memory for tpu_custom_call.1']
    #allocation7 [shape = 'u8[8192]{0}', space=vmem, size = 0x2000, scoped, tag = 'input window, operand 2, single buffered']
    #allocation8 [shape = 'u8[16384]{0}', space=vmem, size = 0x4000, scoped, tag = 'input window, operand 4, single buffered']
    #allocation9 [shape = 's32[1]{0}', space=sflag, size = 0x4, scoped, tag = 'scoped memory for tpu_custom_call.1']
    #allocation10 [shape = 'u8[16384]{0}', space=vmem, size = 0x4000, scoped, tag = 'output window, operand 0']
    #allocation11 [shape = 'u8[65536]{0}', space=vmem, size = 0x10000, scoped, tag = 'output window, operand 1']
    #allocation12 [shape = 's32[2]{0}', space=sflag, size = 0x8, scoped, tag = 'scoped memory for tpu_custom_call.1']
    %13 = vsyncpa [#allocation3], 0
    %s14 = scalar_lea.sflag [#allocation3], 1
    %15 = vsyncpa %s14, 0
    %16 = vsyncpa [#allocation6], 0
    %17 = vsyncpa [#allocation9], 0
    %18 = vsyncpa [#allocation4], 0
    %s19 = scalar_lea.sflag [#allocation4], 1
    %20 = vsyncpa %s19, 0
    %21 = vsyncpa [#allocation12], 0
    %s22 = scalar_lea.sflag [#allocation12], 1
    %23 = vsyncpa %s22, 0
    loop: start=0, step=1, limit=4
    $region2: #{tpu_custom_call.1} parent=1 // loop_pre_header
      _
    $region3: #{tpu_custom_call.1} parent=1 // loop_header
      %s25 = sphi 0, %s29
      %p26 = scmp.ge.s32.totalorder %s25, 4
      %s35 = sphi 0, %s37
      %s38 = sphi 0, %s35
      %s39 = sphi 0, %s38
      %s55 = sphi 0, %s39
      %s59 = sphi 0, %s59
      %s61 = sphi 0, %s59
      %s62 = sphi 0, %s61
      %s76 = sphi 0, %s62
      %s80 = sphi 0, %s80
      %s82 = sphi 0, %s80
      %s83 = sphi 0, %s82
      %s97 = sphi 0, %s83
      %s101 = sphi 0, %s101
      %s103 = sphi 0, %s101
      %s104 = sphi 0, %s103
      %s118 = sphi 0, %s104
      %s122 = sphi 0, %s122
      %s124 = sphi 0, %s122
      %s125 = sphi 0, %s124
      %s139 = sphi 0, %s125
      %s143 = sphi 0, %s143
      %s145 = sphi 0, %s143
      %s146 = sphi 0, %s145
      %s160 = sphi 0, %s146
      %s166 = sphi 0, %s168
      %s169 = sphi 0, %s166
      %s170 = sphi 0, %s169
      %s186 = sphi 0, %s170
      %s192 = sphi 0, %s194
      %s195 = sphi 0, %s192
      %s196 = sphi 0, %s195
      %s212 = sphi 0, %s196
    $region4: #{tpu_custom_call.1} parent=1 // loop_header_branch
      %28 = sbr.rel (%p26) target = $region8
    $region5: #{tpu_custom_call.1} parent=1 // loop_body
      %s30 = ssub.s32 %s25, 1
      %s31 = ssub.s32 %s25, 2
      %s32 = sadd.s32 %s25, 1
      %s33 = ssub.s32 %s25, %s32
      %p34 = scmp.eq.s32.totalorder %s33, 0
      %s36 = sadd.s32 %s35, 1
      %s37 = scalar_select %p34, %s35, %s36
      %p40 = pneg %p34
      %p41 = scmp.eq.s32.totalorder %s25, 1
      %p42 = por %p40, %p41
      %p43 = scmp.ne.s32.totalorder %s35, %s38
      %p44 = scmp.eq.s32.totalorder %s25, 0
      %p45 = por %p43, %p44
      %p46 = scmp.ne.s32.totalorder %s35, %s38
      %p47 = scmp.eq.s32.totalorder %s30, 1
      %p48 = por %p46, %p47
      %p49 = scmp.ne.s32.totalorder %s38, %s39
      %p50 = scmp.eq.s32.totalorder %s30, 0
      %p51 = por %p49, %p50
      %p52 = scmp.ne.s32.totalorder %s38, %s39
      %p53 = scmp.eq.s32.totalorder %s31, 1
      %p54 = por %p52, %p53
      %p56 = scmp.ne.s32.totalorder %s39, %s55
      %p57 = scmp.eq.s32.totalorder %s31, 0
      %p58 = por %p56, %p57
      %s60 = sadd.s32 %s59, 1
      %p63 = scmp.eq.s32.totalorder %s25, 1
      %p64 = scmp.ne.s32.totalorder %s59, %s61
      %p65 = scmp.eq.s32.totalorder %s25, 0
      %p66 = por %p64, %p65
      %p67 = scmp.ne.s32.totalorder %s59, %s61
      %p68 = scmp.eq.s32.totalorder %s30, 1
      %p69 = por %p67, %p68
      %p70 = scmp.ne.s32.totalorder %s61, %s62
      %p71 = scmp.eq.s32.totalorder %s30, 0
      %p72 = por %p70, %p71
      %p73 = scmp.ne.s32.totalorder %s61, %s62
      %p74 = scmp.eq.s32.totalorder %s31, 1
      %p75 = por %p73, %p74
      %p77 = scmp.ne.s32.totalorder %s62, %s76
      %p78 = scmp.eq.s32.totalorder %s31, 0
      %p79 = por %p77, %p78
      %s81 = sadd.s32 %s80, 1
      %p84 = scmp.eq.s32.totalorder %s25, 1
      %p85 = scmp.ne.s32.totalorder %s80, %s82
      %p86 = scmp.eq.s32.totalorder %s25, 0
      %p87 = por %p85, %p86
      %p88 = scmp.ne.s32.totalorder %s80, %s82
      %p89 = scmp.eq.s32.totalorder %s30, 1
      %p90 = por %p88, %p89
      %p91 = scmp.ne.s32.totalorder %s82, %s83
      %p92 = scmp.eq.s32.totalorder %s30, 0
      %p93 = por %p91, %p92
      %p94 = scmp.ne.s32.totalorder %s82, %s83
      %p95 = scmp.eq.s32.totalorder %s31, 1
      %p96 = por %p94, %p95
      %p98 = scmp.ne.s32.totalorder %s83, %s97
      %p99 = scmp.eq.s32.totalorder %s31, 0
      %p100 = por %p98, %p99
      %s102 = sadd.s32 %s101, 1
      %p105 = scmp.eq.s32.totalorder %s25, 1
      %p106 = scmp.ne.s32.totalorder %s101, %s103
      %p107 = scmp.eq.s32.totalorder %s25, 0
      %p108 = por %p106, %p107
      %p109 = scmp.ne.s32.totalorder %s101, %s103
      %p110 = scmp.eq.s32.totalorder %s30, 1
      %p111 = por %p109, %p110
      %p112 = scmp.ne.s32.totalorder %s103, %s104
      %p113 = scmp.eq.s32.totalorder %s30, 0
      %p114 = por %p112, %p113
      %p115 = scmp.ne.s32.totalorder %s103, %s104
      %p116 = scmp.eq.s32.totalorder %s31, 1
      %p117 = por %p115, %p116
      %p119 = scmp.ne.s32.totalorder %s104, %s118
      %p120 = scmp.eq.s32.totalorder %s31, 0
      %p121 = por %p119, %p120
      %s123 = sadd.s32 %s122, 1
      %p126 = scmp.eq.s32.totalorder %s25, 1
      %p127 = scmp.ne.s32.totalorder %s122, %s124
      %p128 = scmp.eq.s32.totalorder %s25, 0
      %p129 = por %p127, %p128
      %p130 = scmp.ne.s32.totalorder %s122, %s124
      %p131 = scmp.eq.s32.totalorder %s30, 1
      %p132 = por %p130, %p131
      %p133 = scmp.ne.s32.totalorder %s124, %s125
      %p134 = scmp.eq.s32.totalorder %s30, 0
      %p135 = por %p133, %p134
      %p136 = scmp.ne.s32.totalorder %s124, %s125
      %p137 = scmp.eq.s32.totalorder %s31, 1
      %p138 = por %p136, %p137
      %p140 = scmp.ne.s32.totalorder %s125, %s139
      %p141 = scmp.eq.s32.totalorder %s31, 0
      %p142 = por %p140, %p141
      %s144 = sadd.s32 %s143, 1
      %p147 = scmp.eq.s32.totalorder %s25, 1
      %p148 = scmp.ne.s32.totalorder %s143, %s145
      %p149 = scmp.eq.s32.totalorder %s25, 0
      %p150 = por %p148, %p149
      %p151 = scmp.ne.s32.totalorder %s143, %s145
      %p152 = scmp.eq.s32.totalorder %s30, 1
      %p153 = por %p151, %p152
      %p154 = scmp.ne.s32.totalorder %s145, %s146
      %p155 = scmp.eq.s32.totalorder %s30, 0
      %p156 = por %p154, %p155
      %p157 = scmp.ne.s32.totalorder %s145, %s146
      %p158 = scmp.eq.s32.totalorder %s31, 1
      %p159 = por %p157, %p158
      %p161 = scmp.ne.s32.totalorder %s146, %s160
      %p162 = scmp.eq.s32.totalorder %s31, 0
      %p163 = por %p161, %p162
      %s164 = ssub.s32 %s25, %s32
      %p165 = scmp.eq.s32.totalorder %s164, 0
      %s167 = sadd.s32 %s166, 1
      %s168 = scalar_select %p165, %s166, %s167
      %p171 = pneg %p165
      %p172 = scmp.eq.s32.totalorder %s25, 1
      %p173 = por %p171, %p172
      %p174 = scmp.ne.s32.totalorder %s166, %s169
      %p175 = scmp.eq.s32.totalorder %s25, 0
      %p176 = por %p174, %p175
      %p177 = scmp.ne.s32.totalorder %s166, %s169
      %p178 = scmp.eq.s32.totalorder %s30, 1
      %p179 = por %p177, %p178
      %p180 = scmp.ne.s32.totalorder %s169, %s170
      %p181 = scmp.eq.s32.totalorder %s30, 0
      %p182 = por %p180, %p181
      %p183 = scmp.ne.s32.totalorder %s169, %s170
      %p184 = scmp.eq.s32.totalorder %s31, 1
      %p185 = por %p183, %p184
      %p187 = scmp.ne.s32.totalorder %s170, %s186
      %p188 = scmp.eq.s32.totalorder %s31, 0
      %p189 = por %p187, %p188
      %s190 = ssub.s32 %s25, %s32
      %p191 = scmp.eq.s32.totalorder %s190, 0
      %s193 = sadd.s32 %s192, 1
      %s194 = scalar_select %p191, %s192, %s193
      %p197 = pneg %p191
      %p198 = scmp.eq.s32.totalorder %s25, 1
      %p199 = por %p197, %p198
      %p200 = scmp.ne.s32.totalorder %s192, %s195
      %p201 = scmp.eq.s32.totalorder %s25, 0
      %p202 = por %p200, %p201
      %p203 = scmp.ne.s32.totalorder %s192, %s195
      %p204 = scmp.eq.s32.totalorder %s30, 1
      %p205 = por %p203, %p204
      %p206 = scmp.ne.s32.totalorder %s195, %s196
      %p207 = scmp.eq.s32.totalorder %s30, 0
      %p208 = por %p206, %p207
      %p209 = scmp.ne.s32.totalorder %s195, %s196
      %p210 = scmp.eq.s32.totalorder %s31, 1
      %p211 = por %p209, %p210
      %p213 = scmp.ne.s32.totalorder %s196, %s212
      %p214 = scmp.eq.s32.totalorder %s31, 0
      %p215 = por %p213, %p214
      %p216 = scmp.le.s32.totalorder 1, %s25
      %p217 = scmp.lt.s32.totalorder %s25, 3
      %p218 = pnand %p216, %p217
      %p219 = pneg %p218
      // Predicated region
      $region9: #{tpu_custom_call.1} parent=5 // pred_check
        _
      $region10: #{tpu_custom_call.1} parent=5 // pred_check_branch
        %221 = sbr.rel (%p218) target = $region12
      $region11: #{tpu_custom_call.1} parent=5 // pred_region
        %s222 = ssub.s32 %s25, 1
        // Predicated region
        $region13: #{tpu_custom_call.1} parent=11 // pred_check
          %p223 = pneg %p72
        $region14: #{tpu_custom_call.1} parent=11 // pred_check_branch
          %225 = sbr.rel (%p223) target = $region16
        $region15: #{tpu_custom_call.1} parent=11 // pred_region
          %s227 = ssub.s32 256, 256
          %228 = vsyncadd [#allocation6], %s227
          %s229 = sshll.u32 [#allocation5], 4
          %s230 = int_to_ptr.vmem [resolvable:$true] %s229
          %235 = dma.hbm_to_vmem [thread:$0]  %s1, 256, %s230, [#allocation6], 64, 64, 4
        $region16: #{tpu_custom_call.1} parent=11 // pred_fallthru
          _
        // Predicated region
        $region17: #{tpu_custom_call.1} parent=11 // pred_check
          %p236 = pneg %p93
        $region18: #{tpu_custom_call.1} parent=11 // pred_check_branch
          %238 = sbr.rel (%p236) target = $region20
        $region19: #{tpu_custom_call.1} parent=11 // pred_region
          %s240 = ssub.s32 256, 256
          %241 = vsyncadd [#allocation6], %s240
          %s242 = sshll.u32 [#allocation7], 4
          %s243 = int_to_ptr.vmem [resolvable:$true] %s242
          %248 = dma.hbm_to_vmem [thread:$0]  %s2, 256, %s243, [#allocation6], 64, 64, 4
        $region20: #{tpu_custom_call.1} parent=11 // pred_fallthru
          _
        // Predicated region
        $region21: #{tpu_custom_call.1} parent=11 // pred_check
          %p249 = pneg %p114
        $region22: #{tpu_custom_call.1} parent=11 // pred_check_branch
          %251 = sbr.rel (%p249) target = $region24
        $region23: #{tpu_custom_call.1} parent=11 // pred_region
          _
        $region24: #{tpu_custom_call.1} parent=11 // pred_fallthru
          _
        // Predicated region
        $region25: #{tpu_custom_call.1} parent=11 // pred_check
          %p252 = pneg %p135
        $region26: #{tpu_custom_call.1} parent=11 // pred_check_branch
          %254 = sbr.rel (%p252) target = $region28
        $region27: #{tpu_custom_call.1} parent=11 // pred_region
          %s256 = ssub.s32 512, 512
          %257 = vsyncadd [#allocation9], %s256
          %s258 = sshll.u32 [#allocation8], 4
          %s259 = int_to_ptr.vmem [resolvable:$true] %s258
          %264 = dma.hbm_to_vmem [thread:$0]  %s4, 512, %s259, [#allocation9], 128, 128, 8
        $region28: #{tpu_custom_call.1} parent=11 // pred_fallthru
          _
        // Predicated region
        $region29: #{tpu_custom_call.1} parent=11 // pred_check
          %p265 = pneg %p156
        $region30: #{tpu_custom_call.1} parent=11 // pred_check_branch
          %267 = sbr.rel (%p265) target = $region32
        $region31: #{tpu_custom_call.1} parent=11 // pred_region
          _
        $region32: #{tpu_custom_call.1} parent=11 // pred_fallthru
          _
      $region12: #{tpu_custom_call.1} parent=5 // pred_fallthru
        _
      %p268 = scmp.lt.s32.totalorder %s25, 2
      // Predicated region
      $region33: #{tpu_custom_call.1} parent=5 // pred_check
        %p269 = pneg %p268
      $region34: #{tpu_custom_call.1} parent=5 // pred_check_branch
        %271 = sbr.rel (%p269) target = $region36
      $region35: #{tpu_custom_call.1} parent=5 // pred_region
        // Predicated region
        $region37: #{tpu_custom_call.1} parent=35 // pred_check
          %p272 = pneg %p45
        $region38: #{tpu_custom_call.1} parent=35 // pred_check_branch
          %274 = sbr.rel (%p272) target = $region40
        $region39: #{tpu_custom_call.1} parent=35 // pred_region
          %s275 = sand.u32 %s35, 1
          %s276 = scalar_lea.sflag [#allocation3], %s275
          %s277 = sand.u32 %s35, 1
          %s278 = smul.addr %s277, 16
          %s279 = scalar_lea.vmem [#allocation2], %s278
          %s280 = smul.u32 2, %s25
          %s282 = ssub.s32 256, 256
          %283 = vsyncadd %s276, %s282
          %s284 = smul.addr %s280, 2
          %s285 = smul.addr %s284, 64
          %s286 = scalar_lea.hbm %s0, %s285
          %s287 = sshll.u32 %s279, 4
          %s288 = int_to_ptr.vmem [resolvable:$true] %s287
          %293 = dma.hbm_to_vmem [thread:$0]  %s286, 256, %s288, %s276, 64, 64, 4
        $region40: #{tpu_custom_call.1} parent=35 // pred_fallthru
          _
      $region36: #{tpu_custom_call.1} parent=5 // pred_fallthru
        _
      %p294 = scmp.le.s32.totalorder 1, %s25
      %p295 = scmp.lt.s32.totalorder %s25, 3
      %p296 = pnand %p294, %p295
      %p297 = pneg %p296
      // Predicated region
      $region41: #{tpu_custom_call.1} parent=5 // pred_check
        _
      $region42: #{tpu_custom_call.1} parent=5 // pred_check_branch
        %299 = sbr.rel (%p296) target = $region44
      $region43: #{tpu_custom_call.1} parent=5 // pred_region
        %s300 = ssub.s32 %s25, 1
        %s301 = sand.u32 %s38, 1
        %s302 = scalar_lea.sflag [#allocation3], %s301
        %s303 = sand.u32 %s38, 1
        %s304 = smul.addr %s303, 16
        %s305 = scalar_lea.vmem [#allocation2], %s304
        // Predicated region
        $region45: #{tpu_custom_call.1} parent=43 // pred_check
          %p306 = pneg %p51
        $region46: #{tpu_custom_call.1} parent=43 // pred_check_branch
          %308 = sbr.rel (%p306) target = $region48
        $region47: #{tpu_custom_call.1} parent=43 // pred_region
          %309 = dma.done %s302, 256
        $region48: #{tpu_custom_call.1} parent=43 // pred_fallthru
          _
        // Predicated region
        $region49: #{tpu_custom_call.1} parent=43 // pred_check
          %p310 = pneg %p72
        $region50: #{tpu_custom_call.1} parent=43 // pred_check_branch
          %312 = sbr.rel (%p310) target = $region52
        $region51: #{tpu_custom_call.1} parent=43 // pred_region
          %313 = dma.done [#allocation6], 256
        $region52: #{tpu_custom_call.1} parent=43 // pred_fallthru
          _
        // Predicated region
        $region53: #{tpu_custom_call.1} parent=43 // pred_check
          %p314 = pneg %p93
        $region54: #{tpu_custom_call.1} parent=43 // pred_check_branch
          %316 = sbr.rel (%p314) target = $region56
        $region55: #{tpu_custom_call.1} parent=43 // pred_region
          %317 = dma.done [#allocation6], 256
        $region56: #{tpu_custom_call.1} parent=43 // pred_fallthru
          _
        // Predicated region
        $region57: #{tpu_custom_call.1} parent=43 // pred_check
          %p318 = pneg %p135
        $region58: #{tpu_custom_call.1} parent=43 // pred_check_branch
          %320 = sbr.rel (%p318) target = $region60
        $region59: #{tpu_custom_call.1} parent=43 // pred_region
          %321 = dma.done [#allocation9], 512
        $region60: #{tpu_custom_call.1} parent=43 // pred_fallthru
          _
        %s322 = sand.u32 %s38, 1
        %s323 = scalar_lea.sflag [#allocation3], %s322
        %s324 = sand.u32 %s38, 1
        %s325 = smul.addr %s324, 16
        %s326 = scalar_lea.vmem [#allocation2], %s325
        %p327 = pneg %p51
        %p328 = pneg %p48
        %p329 = pneg %p72
        %p330 = pneg %p69
        %p331 = pneg %p93
        %p332 = pneg %p90
        %p333 = pneg %p114
        %p334 = pneg %p111
        %p335 = pneg %p135
        %p336 = pneg %p132
        %p337 = pneg %p156
        %p338 = pneg %p153
        %p339 = pneg %p182
        %p340 = pneg %p179
        %s341 = sand.u32 %s169, 1
        %s342 = scalar_lea.sflag [#allocation4], %s341
        %s343 = sand.u32 %s169, 1
        %s344 = smul.addr %s343, 16
        %s345 = scalar_lea.vmem [#allocation10], %s344
        %p346 = pneg %p208
        %p347 = pneg %p205
        %s348 = sand.u32 %s195, 1
        %s349 = scalar_lea.sflag [#allocation12], %s348
        %s350 = sand.u32 %s195, 1
        %s351 = smul.addr %s350, 64
        %s352 = scalar_lea.vmem [#allocation11], %s351
        %s353 = smul.u32 2, %s30
        %s354 = smul.u32 2, %s30
        %s355 = smul.u32 2, %s30
        %v357 = vld [vmem:[%s305] sm:$0xf]
        %v358 = vld [vmem:[%s305 + $0x4] sm:$0xf]
        %v359 = vld [vmem:[%s305 + $0x8] sm:$0xf]
        %v360 = vld [vmem:[%s305 + $0xc] sm:$0xf]
        %v361 = vld [vmem:[#allocation7] sm:$0xf]
        %v362 = vld [vmem:[#allocation7 + $0x4] sm:$0xf]
        %v363 = vld [vmem:[#allocation7 + $0x8] sm:$0xf]
        %v364 = vld [vmem:[#allocation7 + $0xc] sm:$0xf]
        %v365 = vld [vmem:[%s3] sm:$0x1]
        %v367 = vlaneseq
        %v368 = vshrl.u32 %v367, 7
        %v369 = vsub.s32 0, %v368
        %v370 = vrot.slane %v365, %v369
        %v376 = vunpack.c.l.b16 %v357
        %v377 = vunpack.c.l.b16 %v358
        %v378 = vunpack.c.l.b16 %v359
        %v379 = vunpack.c.l.b16 %v360
        %v380 = vpack.c.b16 %v377, %v376
        %v381 = vpack.c.b16 %v379, %v378
        %v386 = vunpack.c.l.b16 %v361
        %v387 = vunpack.c.l.b16 %v362
        %v388 = vunpack.c.l.b16 %v363
        %v389 = vunpack.c.l.b16 %v364
        %v390 = vpack.c.b16 %v387, %v386
        %v391 = vpack.c.b16 %v389, %v388
        %vm394 = vcmask 261120
        %v396 = vsel %vm394, %v380, 0
        %v399 = vsel %vm394, %v381, 0
        %401 = vmatprep.subr.bf16.mxu0 0
        %402 = vmatpush1.bf16.msra.mxu0 %v390
        %403 = vmatprep.subr.bf16.mxu0 0
        %404 = vmatpush1.bf16.msra.mxu0 %v391
        %405 = vmatprep.subr.bf16.mxu0 0
        %406 = vmatpush1.bf16.msra.mxu0 0
        %407 = vmatprep.subr.bf16.mxu0 0
        %408 = vmatpush1.bf16.msra.mxu0 0
        %409 = vmatprep.subr.bf16.mxu0 0
        %410 = vmatpush1.bf16.msra.mxu0 0
        %411 = vmatprep.subr.bf16.mxu0 0
        %412 = vmatpush1.bf16.msra.mxu0 0
        %413 = vmatprep.subr.bf16.mxu0 0
        %414 = vmatpush1.bf16.msra.mxu0 0
        %415 = vmatprep.subr.bf16.mxu0 0
        %416 = vmatpush1.bf16.msra.mxu0 0
        %417 = vmatprep.subr.bf16.mxu0 0
        %418 = vmatpush1.bf16.msra.mxu0 0
        %419 = vmatprep.subr.bf16.mxu0 0
        %420 = vmatpush1.bf16.msra.mxu0 0
        %421 = vmatprep.subr.bf16.mxu0 0
        %422 = vmatpush1.bf16.msra.mxu0 0
        %423 = vmatprep.subr.bf16.mxu0 0
        %424 = vmatpush1.bf16.msra.mxu0 0
        %425 = vmatprep.subr.bf16.mxu0 0
        %426 = vmatpush1.bf16.msra.mxu0 0
        %427 = vmatprep.subr.bf16.mxu0 0
        %428 = vmatpush1.bf16.msra.mxu0 0
        %429 = vmatprep.subr.bf16.mxu0 0
        %430 = vmatpush1.bf16.msra.mxu0 0
        %431 = vmatprep.subr.bf16.mxu0 0
        %432 = vmatpush1.bf16.msra.mxu0 0
        %433 = vmatprep.mubr.bf16.mxu0 0
        %434 = vmatmul.mubr.bf16.gmra.mrb[0].mxu0 %v396
        %v435 = vpop.f32.mrb[0].mxu0
        %v436 = vadd.f32 %v370, %v435
        %v437 = vpop.f32.mrb[0].mxu0
        %v438 = vpop.f32.mrb[0].mxu0
        %v439 = vadd.f32 %v370, %v438
        %v440 = vpop.f32.mrb[0].mxu0
        %441 = vmatprep.mubr.bf16.mxu0 0
        %442 = vmatmul.mubr.bf16.gmra.mrb[0].mxu0 %v399
        %v443 = vpop.f32.mrb[0].mxu0
        %v444 = vadd.f32 %v370, %v443
        %v445 = vpop.f32.mrb[0].mxu0
        %v446 = vpop.f32.mrb[0].mxu0
        %v447 = vadd.f32 %v370, %v446
        %v448 = vpop.f32.mrb[0].mxu0
        %449 = vdwg.mxu0
        %v450 = vld [vmem:[#allocation5] sm:$0xf]
        %v451 = vld [vmem:[#allocation5 + $0x4] sm:$0xf]
        %v452 = vld [vmem:[#allocation5 + $0x8] sm:$0xf]
        %v453 = vld [vmem:[#allocation5 + $0xc] sm:$0xf]
        %v458 = vunpack.c.l.b16 %v450
        %v459 = vunpack.c.l.b16 %v451
        %v460 = vunpack.c.l.b16 %v452
        %v461 = vunpack.c.l.b16 %v453
        %v462 = vpack.c.b16 %v459, %v458
        %v463 = vpack.c.b16 %v461, %v460
        %v465 = vsel %vm394, %v462, 0
        %v468 = vsel %vm394, %v463, 0
        %470 = vmatprep.subr.bf16.mxu0 0
        %471 = vmatpush1.bf16.xpose.msra.mxu0 %v396
        %472 = vmatprep.subr.bf16.mxu0 0
        %473 = vmatpush1.bf16.xpose.msra.mxu0 0
        %474 = vmatprep.subr.bf16.mxu0 0
        %475 = vmatpush1.bf16.xpose.msra.mxu0 0
        %476 = vmatprep.subr.bf16.mxu0 0
        %477 = vmatpush1.bf16.xpose.msra.mxu0 0
        %478 = vmatprep.subr.bf16.mxu0 0
        %479 = vmatpush1.bf16.xpose.msra.mxu0 0
        %480 = vmatprep.subr.bf16.mxu0 0
        %481 = vmatpush1.bf16.xpose.msra.mxu0 0
        %482 = vmatprep.subr.bf16.mxu0 0
        %483 = vmatpush1.bf16.xpose.msra.mxu0 0
        %484 = vmatprep.subr.bf16.mxu0 0
        %485 = vmatpush1.bf16.xpose.msra.mxu0 0
        %486 = vmatprep.subr.bf16.mxu0 0
        %487 = vmatpush1.bf16.xpose.msra.mxu0 0
        %488 = vmatprep.subr.bf16.mxu0 0
        %489 = vmatpush1.bf16.xpose.msra.mxu0 0
        %490 = vmatprep.subr.bf16.mxu0 0
        %491 = vmatpush1.bf16.xpose.msra.mxu0 0
        %492 = vmatprep.subr.bf16.mxu0 0
        %493 = vmatpush1.bf16.xpose.msra.mxu0 0
        %494 = vmatprep.subr.bf16.mxu0 0
        %495 = vmatpush1.bf16.xpose.msra.mxu0 0
        %496 = vmatprep.subr.bf16.mxu0 0
        %497 = vmatpush1.bf16.xpose.msra.mxu0 0
        %498 = vmatprep.subr.bf16.mxu0 0
        %499 = vmatpush1.bf16.xpose.msra.mxu0 0
        %500 = vmatprep.subr.bf16.mxu0 0
        %501 = vmatpush1.bf16.xpose.msra.mxu0 0
        %502 = vmatprep.mubr.bf16.mxu0 0
        %503 = vmatmul.mubr.bf16.gmra.mrb[0].mxu0 %v465
        %v504 = vpop.f32.mrb[0].mxu0
        %v505 = vadd.f32 0.0, %v504
        %v506 = vpop.f32.mrb[0].mxu0
        %v507 = vpop.f32.mrb[0].mxu0
        %v508 = vadd.f32 0.0, %v507
        %v509 = vpop.f32.mrb[0].mxu0
        %510 = vmatprep.mubr.bf16.mxu0 0
        %511 = vmatmul.mubr.bf16.gmra.mrb[0].mxu0 %v468
        %v512 = vpop.f32.mrb[0].mxu0
        %v513 = vadd.f32 0.0, %v512
        %v514 = vpop.f32.mrb[0].mxu0
        %v515 = vpop.f32.mrb[0].mxu0
        %v516 = vadd.f32 0.0, %v515
        %v517 = vpop.f32.mrb[0].mxu0
        %518 = vdwg.mxu0
        %vm519 = vcmask 130048
        %v520 = vsel %vm519, %v505, -inf
        %521 = vmax.xlane.f32.xlu0 %v520
        %v522 = vpop.xlane.xlu0 %521
        %v523 = vsel %vm519, %v508, -inf
        %524 = vmax.xlane.f32.xlu0 %v523
        %v525 = vpop.xlane.xlu0 %524
        %v526 = vsel %vm519, %v513, -inf
        %527 = vmax.xlane.f32.xlu0 %v526
        %v528 = vpop.xlane.xlu0 %527
        %v529 = vsel %vm519, %v516, -inf
        %530 = vmax.xlane.f32.xlu0 %v529
        %v531 = vpop.xlane.xlu0 %530
        %v532 = vsub.f32 %v505, %v522
        %v533 = vsub.f32 %v508, %v525
        %v534 = vsub.f32 %v513, %v528
        %v535 = vsub.f32 %v516, %v531
        %v536 = vmul.f32 %v532, 1.442695
        %v537 = vpow.pop %v536
        %v538 = vmul.f32 %v533, 1.442695
        %v539 = vpow.pop %v538
        %v540 = vmul.f32 %v534, 1.442695
        %v541 = vpow.pop %v540
        %v542 = vmul.f32 %v535, 1.442695
        %v543 = vpow.pop %v542
        %v544 = vsel %vm519, %v537, 0.0
        %545 = vadd.xlane.f32.xlu0 %v544
        %v546 = vpop.xlane.xlu0 %545
        %v547 = vsel %vm519, %v539, 0.0
        %548 = vadd.xlane.f32.xlu0 %v547
        %v549 = vpop.xlane.xlu0 %548
        %v550 = vsel %vm519, %v541, 0.0
        %551 = vadd.xlane.f32.xlu0 %v550
        %v552 = vpop.xlane.xlu0 %551
        %v553 = vsel %vm519, %v543, 0.0
        %554 = vadd.xlane.f32.xlu0 %v553
        %v555 = vpop.xlane.xlu0 %554
        %v556 = vrcp.pop %v546
        %v557 = vrcp.pop %v549
        %v558 = vrcp.pop %v552
        %v559 = vrcp.pop %v555
        %v560 = vmul.f32 %v537, %v556
        %v561 = vmul.f32 %v539, %v557
        %v562 = vmul.f32 %v541, %v558
        %v563 = vmul.f32 %v543, %v559
        %564 = vst.msk [vmem:[%s352] sm:$0xff] %vm519, %v560
        %565 = vst.msk [vmem:[%s352 + $0x8] sm:$0xff] %vm519, %v561
        %566 = vst.msk [vmem:[%s352 + $0x10] sm:$0xff] %vm519, %v562
        %567 = vst.msk [vmem:[%s352 + $0x18] sm:$0xff] %vm519, %v563
        %v569 = vsel %vm519, %v560, 0
        %571 = vmatprep.subr.mxu0 0.0
        %572 = vmatpush1.msra.mxu0 %v436
        %573 = vmatprep.subr.mxu0 0.0
        %574 = vmatpush1.msra.mxu0 %v439
        %575 = vmatprep.subr.mxu0 0.0
        %576 = vmatpush1.msra.mxu0 0.0
        %577 = vmatprep.subr.mxu0 0.0
        %578 = vmatpush1.msra.mxu0 0.0
        %579 = vmatprep.subr.mxu0 0.0
        %580 = vmatpush1.msra.mxu0 0.0
        %581 = vmatprep.subr.mxu0 0.0
        %582 = vmatpush1.msra.mxu0 0.0
        %583 = vmatprep.subr.mxu0 0.0
        %584 = vmatpush1.msra.mxu0 0.0
        %585 = vmatprep.subr.mxu0 0.0
        %586 = vmatpush1.msra.mxu0 0.0
        %587 = vmatprep.subr.mxu0 0.0
        %588 = vmatpush1.msra.mxu0 0.0
        %589 = vmatprep.subr.mxu0 0.0
        %590 = vmatpush1.msra.mxu0 0.0
        %591 = vmatprep.subr.mxu0 0.0
        %592 = vmatpush1.msra.mxu0 0.0
        %593 = vmatprep.subr.mxu0 0.0
        %594 = vmatpush1.msra.mxu0 0.0
        %595 = vmatprep.subr.mxu0 0.0
        %596 = vmatpush1.msra.mxu0 0.0
        %597 = vmatprep.subr.mxu0 0.0
        %598 = vmatpush1.msra.mxu0 0.0
        %599 = vmatprep.subr.mxu0 0.0
        %600 = vmatpush1.msra.mxu0 0.0
        %601 = vmatprep.subr.mxu0 0.0
        %602 = vmatpush1.msra.mxu0 0.0
        %603 = vmatprep.subr.mxu0 0.0
        %604 = vmatpush1.msra.mxu0 0.0
        %605 = vmatprep.subr.mxu0 0.0
        %606 = vmatpush1.msra.mxu0 0.0
        %607 = vmatprep.subr.mxu0 0.0
        %608 = vmatpush1.msra.mxu0 0.0
        %609 = vmatprep.subr.mxu0 0.0
        %610 = vmatpush1.msra.mxu0 0.0
        %611 = vmatprep.subr.mxu0 0.0
        %612 = vmatpush1.msra.mxu0 0.0
        %613 = vmatprep.subr.mxu0 0.0
        %614 = vmatpush1.msra.mxu0 0.0
        %615 = vmatprep.subr.mxu0 0.0
        %616 = vmatpush1.msra.mxu0 0.0
        %617 = vmatprep.subr.mxu0 0.0
        %618 = vmatpush1.msra.mxu0 0.0
        %619 = vmatprep.subr.mxu0 0.0
        %620 = vmatpush1.msra.mxu0 0.0
        %621 = vmatprep.subr.mxu0 0.0
        %622 = vmatpush1.msra.mxu0 0.0
        %623 = vmatprep.subr.mxu0 0.0
        %624 = vmatpush1.msra.mxu0 0.0
        %625 = vmatprep.subr.mxu0 0.0
        %626 = vmatpush1.msra.mxu0 0.0
        %627 = vmatprep.subr.mxu0 0.0
        %628 = vmatpush1.msra.mxu0 0.0
        %629 = vmatprep.subr.mxu0 0.0
        %630 = vmatpush1.msra.mxu0 0.0
        %631 = vmatprep.subr.mxu0 0.0
        %632 = vmatpush1.msra.mxu0 0.0
        %633 = vmatprep.subr.mxu0 0.0
        %634 = vmatpush1.msra.mxu0 0.0
        %635 = vmatprep.mubr.f32.mxu0 0.0
        %636 = vmatmul.mubr.f32.gmra.mrb[0].mxu0 %v569
        %v637 = vpop.f32.mrb[0].mxu0
        %v638 = vadd.f32 0.0, %v637
        %v639 = vpop.f32.mrb[0].mxu0
        %640 = vdwg.mxu0
        %643 = vrot.lane.b32.xlu0 %v436, 120
        %v644 = vpop.permute.xlu0 %643
        %645 = vrot.lane.b32.xlu0 %v439, 120
        %v646 = vpop.permute.xlu0 %645
        %v650 = vsel %vm519, %v561, 0
        %652 = vmatprep.subr.mxu0 0.0
        %653 = vmatpush1.msra.mxu0 %v644
        %654 = vmatprep.subr.mxu0 0.0
        %655 = vmatpush1.msra.mxu0 %v646
        %656 = vmatprep.subr.mxu0 0.0
        %657 = vmatpush1.msra.mxu0 0.0
        %658 = vmatprep.subr.mxu0 0.0
        %659 = vmatpush1.msra.mxu0 0.0
        %660 = vmatprep.subr.mxu0 0.0
        %661 = vmatpush1.msra.mxu0 0.0
        %662 = vmatprep.subr.mxu0 0.0
        %663 = vmatpush1.msra.mxu0 0.0
        %664 = vmatprep.subr.mxu0 0.0
        %665 = vmatpush1.msra.mxu0 0.0
        %666 = vmatprep.subr.mxu0 0.0
        %667 = vmatpush1.msra.mxu0 0.0
        %668 = vmatprep.subr.mxu0 0.0
        %669 = vmatpush1.msra.mxu0 0.0
        %670 = vmatprep.subr.mxu0 0.0
        %671 = vmatpush1.msra.mxu0 0.0
        %672 = vmatprep.subr.mxu0 0.0
        %673 = vmatpush1.msra.mxu0 0.0
        %674 = vmatprep.subr.mxu0 0.0
        %675 = vmatpush1.msra.mxu0 0.0
        %676 = vmatprep.subr.mxu0 0.0
        %677 = vmatpush1.msra.mxu0 0.0
        %678 = vmatprep.subr.mxu0 0.0
        %679 = vmatpush1.msra.mxu0 0.0
        %680 = vmatprep.subr.mxu0 0.0
        %681 = vmatpush1.msra.mxu0 0.0
        %682 = vmatprep.subr.mxu0 0.0
        %683 = vmatpush1.msra.mxu0 0.0
        %684 = vmatprep.subr.mxu0 0.0
        %685 = vmatpush1.msra.mxu0 0.0
        %686 = vmatprep.subr.mxu0 0.0
        %687 = vmatpush1.msra.mxu0 0.0
        %688 = vmatprep.subr.mxu0 0.0
        %689 = vmatpush1.msra.mxu0 0.0
        %690 = vmatprep.subr.mxu0 0.0
        %691 = vmatpush1.msra.mxu0 0.0
        %692 = vmatprep.subr.mxu0 0.0
        %693 = vmatpush1.msra.mxu0 0.0
        %694 = vmatprep.subr.mxu0 0.0
        %695 = vmatpush1.msra.mxu0 0.0
        %696 = vmatprep.subr.mxu0 0.0
        %697 = vmatpush1.msra.mxu0 0.0
        %698 = vmatprep.subr.mxu0 0.0
        %699 = vmatpush1.msra.mxu0 0.0
        %700 = vmatprep.subr.mxu0 0.0
        %701 = vmatpush1.msra.mxu0 0.0
        %702 = vmatprep.subr.mxu0 0.0
        %703 = vmatpush1.msra.mxu0 0.0
        %704 = vmatprep.subr.mxu0 0.0
        %705 = vmatpush1.msra.mxu0 0.0
        %706 = vmatprep.subr.mxu0 0.0
        %707 = vmatpush1.msra.mxu0 0.0
        %708 = vmatprep.subr.mxu0 0.0
        %709 = vmatpush1.msra.mxu0 0.0
        %710 = vmatprep.subr.mxu0 0.0
        %711 = vmatpush1.msra.mxu0 0.0
        %712 = vmatprep.subr.mxu0 0.0
        %713 = vmatpush1.msra.mxu0 0.0
        %714 = vmatprep.subr.mxu0 0.0
        %715 = vmatpush1.msra.mxu0 0.0
        %716 = vmatprep.mubr.f32.mxu0 0.0
        %717 = vmatmul.mubr.f32.gmra.mrb[0].mxu0 %v650
        %v718 = vpop.f32.mrb[0].mxu0
        %v719 = vadd.f32 0.0, %v718
        %v720 = vpop.f32.mrb[0].mxu0
        %721 = vdwg.mxu0
        %722 = vrot.lane.b32.xlu0 %v436, 112
        %v723 = vpop.permute.xlu0 %722
        %724 = vrot.lane.b32.xlu0 %v439, 112
        %v725 = vpop.permute.xlu0 %724
        %v729 = vsel %vm519, %v562, 0
        %731 = vmatprep.subr.mxu0 0.0
        %732 = vmatpush1.msra.mxu0 %v723
        %733 = vmatprep.subr.mxu0 0.0
        %734 = vmatpush1.msra.mxu0 %v725
        %735 = vmatprep.subr.mxu0 0.0
        %736 = vmatpush1.msra.mxu0 0.0
        %737 = vmatprep.subr.mxu0 0.0
        %738 = vmatpush1.msra.mxu0 0.0
        %739 = vmatprep.subr.mxu0 0.0
        %740 = vmatpush1.msra.mxu0 0.0
        %741 = vmatprep.subr.mxu0 0.0
        %742 = vmatpush1.msra.mxu0 0.0
        %743 = vmatprep.subr.mxu0 0.0
        %744 = vmatpush1.msra.mxu0 0.0
        %745 = vmatprep.subr.mxu0 0.0
        %746 = vmatpush1.msra.mxu0 0.0
        %747 = vmatprep.subr.mxu0 0.0
        %748 = vmatpush1.msra.mxu0 0.0
        %749 = vmatprep.subr.mxu0 0.0
        %750 = vmatpush1.msra.mxu0 0.0
        %751 = vmatprep.subr.mxu0 0.0
        %752 = vmatpush1.msra.mxu0 0.0
        %753 = vmatprep.subr.mxu0 0.0
        %754 = vmatpush1.msra.mxu0 0.0
        %755 = vmatprep.subr.mxu0 0.0
        %756 = vmatpush1.msra.mxu0 0.0
        %757 = vmatprep.subr.mxu0 0.0
        %758 = vmatpush1.msra.mxu0 0.0
        %759 = vmatprep.subr.mxu0 0.0
        %760 = vmatpush1.msra.mxu0 0.0
        %761 = vmatprep.subr.mxu0 0.0
        %762 = vmatpush1.msra.mxu0 0.0
        %763 = vmatprep.subr.mxu0 0.0
        %764 = vmatpush1.msra.mxu0 0.0
        %765 = vmatprep.subr.mxu0 0.0
        %766 = vmatpush1.msra.mxu0 0.0
        %767 = vmatprep.subr.mxu0 0.0
        %768 = vmatpush1.msra.mxu0 0.0
        %769 = vmatprep.subr.mxu0 0.0
        %770 = vmatpush1.msra.mxu0 0.0
        %771 = vmatprep.subr.mxu0 0.0
        %772 = vmatpush1.msra.mxu0 0.0
        %773 = vmatprep.subr.mxu0 0.0
        %774 = vmatpush1.msra.mxu0 0.0
        %775 = vmatprep.subr.mxu0 0.0
        %776 = vmatpush1.msra.mxu0 0.0
        %777 = vmatprep.subr.mxu0 0.0
        %778 = vmatpush1.msra.mxu0 0.0
        %779 = vmatprep.subr.mxu0 0.0
        %780 = vmatpush1.msra.mxu0 0.0
        %781 = vmatprep.subr.mxu0 0.0
        %782 = vmatpush1.msra.mxu0 0.0
        %783 = vmatprep.subr.mxu0 0.0
        %784 = vmatpush1.msra.mxu0 0.0
        %785 = vmatprep.subr.mxu0 0.0
        %786 = vmatpush1.msra.mxu0 0.0
        %787 = vmatprep.subr.mxu0 0.0
        %788 = vmatpush1.msra.mxu0 0.0
        %789 = vmatprep.subr.mxu0 0.0
        %790 = vmatpush1.msra.mxu0 0.0
        %791 = vmatprep.subr.mxu0 0.0
        %792 = vmatpush1.msra.mxu0 0.0
        %793 = vmatprep.subr.mxu0 0.0
        %794 = vmatpush1.msra.mxu0 0.0
        %795 = vmatprep.mubr.f32.mxu0 0.0
        %796 = vmatmul.mubr.f32.gmra.mrb[0].mxu0 %v729
        %v797 = vpop.f32.mrb[0].mxu0
        %v798 = vadd.f32 0.0, %v797
        %v799 = vpop.f32.mrb[0].mxu0
        %800 = vdwg.mxu0
        %801 = vrot.lane.b32.xlu0 %v436, 104
        %v802 = vpop.permute.xlu0 %801
        %803 = vrot.lane.b32.xlu0 %v439, 104
        %v804 = vpop.permute.xlu0 %803
        %v808 = vsel %vm519, %v563, 0
        %810 = vmatprep.subr.mxu0 0.0
        %811 = vmatpush1.msra.mxu0 %v802
        %812 = vmatprep.subr.mxu0 0.0
        %813 = vmatpush1.msra.mxu0 %v804
        %814 = vmatprep.subr.mxu0 0.0
        %815 = vmatpush1.msra.mxu0 0.0
        %816 = vmatprep.subr.mxu0 0.0
        %817 = vmatpush1.msra.mxu0 0.0
        %818 = vmatprep.subr.mxu0 0.0
        %819 = vmatpush1.msra.mxu0 0.0
        %820 = vmatprep.subr.mxu0 0.0
        %821 = vmatpush1.msra.mxu0 0.0
        %822 = vmatprep.subr.mxu0 0.0
        %823 = vmatpush1.msra.mxu0 0.0
        %824 = vmatprep.subr.mxu0 0.0
        %825 = vmatpush1.msra.mxu0 0.0
        %826 = vmatprep.subr.mxu0 0.0
        %827 = vmatpush1.msra.mxu0 0.0
        %828 = vmatprep.subr.mxu0 0.0
        %829 = vmatpush1.msra.mxu0 0.0
        %830 = vmatprep.subr.mxu0 0.0
        %831 = vmatpush1.msra.mxu0 0.0
        %832 = vmatprep.subr.mxu0 0.0
        %833 = vmatpush1.msra.mxu0 0.0
        %834 = vmatprep.subr.mxu0 0.0
        %835 = vmatpush1.msra.mxu0 0.0
        %836 = vmatprep.subr.mxu0 0.0
        %837 = vmatpush1.msra.mxu0 0.0
        %838 = vmatprep.subr.mxu0 0.0
        %839 = vmatpush1.msra.mxu0 0.0
        %840 = vmatprep.subr.mxu0 0.0
        %841 = vmatpush1.msra.mxu0 0.0
        %842 = vmatprep.subr.mxu0 0.0
        %843 = vmatpush1.msra.mxu0 0.0
        %844 = vmatprep.subr.mxu0 0.0
        %845 = vmatpush1.msra.mxu0 0.0
        %846 = vmatprep.subr.mxu0 0.0
        %847 = vmatpush1.msra.mxu0 0.0
        %848 = vmatprep.subr.mxu0 0.0
        %849 = vmatpush1.msra.mxu0 0.0
        %850 = vmatprep.subr.mxu0 0.0
        %851 = vmatpush1.msra.mxu0 0.0
        %852 = vmatprep.subr.mxu0 0.0
        %853 = vmatpush1.msra.mxu0 0.0
        %854 = vmatprep.subr.mxu0 0.0
        %855 = vmatpush1.msra.mxu0 0.0
        %856 = vmatprep.subr.mxu0 0.0
        %857 = vmatpush1.msra.mxu0 0.0
        %858 = vmatprep.subr.mxu0 0.0
        %859 = vmatpush1.msra.mxu0 0.0
        %860 = vmatprep.subr.mxu0 0.0
        %861 = vmatpush1.msra.mxu0 0.0
        %862 = vmatprep.subr.mxu0 0.0
        %863 = vmatpush1.msra.mxu0 0.0
        %864 = vmatprep.subr.mxu0 0.0
        %865 = vmatpush1.msra.mxu0 0.0
        %866 = vmatprep.subr.mxu0 0.0
        %867 = vmatpush1.msra.mxu0 0.0
        %868 = vmatprep.subr.mxu0 0.0
        %869 = vmatpush1.msra.mxu0 0.0
        %870 = vmatprep.subr.mxu0 0.0
        %871 = vmatpush1.msra.mxu0 0.0
        %872 = vmatprep.subr.mxu0 0.0
        %873 = vmatpush1.msra.mxu0 0.0
        %874 = vmatprep.mubr.f32.mxu0 0.0
        %875 = vmatmul.mubr.f32.gmra.mrb[0].mxu0 %v808
        %v876 = vpop.f32.mrb[0].mxu0
        %v877 = vadd.f32 0.0, %v876
        %v878 = vpop.f32.mrb[0].mxu0
        %879 = vdwg.mxu0
        %881 = vrot.lane.b32.xlu0 %v719, 8
        %v882 = vpop.permute.xlu0 %881
        %885 = vrot.lane.b32.xlu0 %v798, 16
        %v886 = vpop.permute.xlu0 %885
        %889 = vrot.lane.b32.xlu0 %v877, 24
        %v890 = vpop.permute.xlu0 %889
        %vm892 = vcmask 64512
        %v893 = vsel %vm892, %v638, %v882
        %v894 = vsel %vm519, %v893, %v886
        %vm895 = vcmask 195584
        %v896 = vsel %vm895, %v894, %v890
        %v897 = vld [vmem:[#allocation8] sm:$0xff]
        %v898 = vld [vmem:[#allocation8 + $0x8] sm:$0xff]
        %v899 = vld [vmem:[#allocation8 + $0x10] sm:$0xff]
        %v900 = vld [vmem:[#allocation8 + $0x18] sm:$0xff]
        %v901 = vld [vmem:[%s5] sm:$0xff]
        %v903 = vsel %vm394, %v896, 0
        %905 = vmatprep.subr.mxu0 0.0
        %906 = vmatpush1.msra.mxu0 %v897
        %907 = vmatprep.subr.mxu0 0.0
        %908 = vmatpush1.msra.mxu0 %v898
        %909 = vmatprep.subr.mxu0 0.0
        %910 = vmatpush1.msra.mxu0 %v899
        %911 = vmatprep.subr.mxu0 0.0
        %912 = vmatpush1.msra.mxu0 %v900
        %913 = vmatprep.subr.mxu0 0.0
        %914 = vmatpush1.msra.mxu0 0.0
        %915 = vmatprep.subr.mxu0 0.0
        %916 = vmatpush1.msra.mxu0 0.0
        %917 = vmatprep.subr.mxu0 0.0
        %918 = vmatpush1.msra.mxu0 0.0
        %919 = vmatprep.subr.mxu0 0.0
        %920 = vmatpush1.msra.mxu0 0.0
        %921 = vmatprep.subr.mxu0 0.0
        %922 = vmatpush1.msra.mxu0 0.0
        %923 = vmatprep.subr.mxu0 0.0
        %924 = vmatpush1.msra.mxu0 0.0
        %925 = vmatprep.subr.mxu0 0.0
        %926 = vmatpush1.msra.mxu0 0.0
        %927 = vmatprep.subr.mxu0 0.0
        %928 = vmatpush1.msra.mxu0 0.0
        %929 = vmatprep.subr.mxu0 0.0
        %930 = vmatpush1.msra.mxu0 0.0
        %931 = vmatprep.subr.mxu0 0.0
        %932 = vmatpush1.msra.mxu0 0.0
        %933 = vmatprep.subr.mxu0 0.0
        %934 = vmatpush1.msra.mxu0 0.0
        %935 = vmatprep.subr.mxu0 0.0
        %936 = vmatpush1.msra.mxu0 0.0
        %937 = vmatprep.subr.mxu0 0.0
        %938 = vmatpush1.msra.mxu0 0.0
        %939 = vmatprep.subr.mxu0 0.0
        %940 = vmatpush1.msra.mxu0 0.0
        %941 = vmatprep.subr.mxu0 0.0
        %942 = vmatpush1.msra.mxu0 0.0
        %943 = vmatprep.subr.mxu0 0.0
        %944 = vmatpush1.msra.mxu0 0.0
        %945 = vmatprep.subr.mxu0 0.0
        %946 = vmatpush1.msra.mxu0 0.0
        %947 = vmatprep.subr.mxu0 0.0
        %948 = vmatpush1.msra.mxu0 0.0
        %949 = vmatprep.subr.mxu0 0.0
        %950 = vmatpush1.msra.mxu0 0.0
        %951 = vmatprep.subr.mxu0 0.0
        %952 = vmatpush1.msra.mxu0 0.0
        %953 = vmatprep.subr.mxu0 0.0
        %954 = vmatpush1.msra.mxu0 0.0
        %955 = vmatprep.subr.mxu0 0.0
        %956 = vmatpush1.msra.mxu0 0.0
        %957 = vmatprep.subr.mxu0 0.0
        %958 = vmatpush1.msra.mxu0 0.0
        %959 = vmatprep.subr.mxu0 0.0
        %960 = vmatpush1.msra.mxu0 0.0
        %961 = vmatprep.subr.mxu0 0.0
        %962 = vmatpush1.msra.mxu0 0.0
        %963 = vmatprep.subr.mxu0 0.0
        %964 = vmatpush1.msra.mxu0 0.0
        %965 = vmatprep.subr.mxu0 0.0
        %966 = vmatpush1.msra.mxu0 0.0
        %967 = vmatprep.subr.mxu0 0.0
        %968 = vmatpush1.msra.mxu0 0.0
        %969 = vmatprep.mubr.f32.mxu0 0.0
        %970 = vmatmul.mubr.f32.gmra.mrb[0].mxu0 %v903
        %v971 = vpop.f32.mrb[0].mxu0
        %v972 = vadd.f32 %v901, %v971
        %v973 = vpop.f32.mrb[0].mxu0
        %974 = vdwg.mxu0
        %975 = vst.msk [vmem:[%s345] sm:$0xff] %vm394, %v972
        %v976 = vld [vmem:[#allocation5] sm:$0xf]
        %v977 = vld [vmem:[#allocation5 + $0x4] sm:$0xf]
        %v978 = vld [vmem:[#allocation5 + $0x8] sm:$0xf]
        %v979 = vld [vmem:[#allocation5 + $0xc] sm:$0xf]
        %v984 = vunpack.c.l.b16 %v976
        %v985 = vunpack.c.l.b16 %v977
        %v986 = vunpack.c.l.b16 %v978
        %v987 = vunpack.c.l.b16 %v979
        %v988 = vpack.c.b16 %v985, %v984
        %v989 = vpack.c.b16 %v987, %v986
        %v991 = vsel %vm394, %v988, 0
        %v994 = vsel %vm394, %v989, 0
        %996 = vmatprep.subr.bf16.mxu0 0
        %997 = vmatpush1.bf16.xpose.msra.mxu0 %v399
        %998 = vmatprep.subr.bf16.mxu0 0
        %999 = vmatpush1.bf16.xpose.msra.mxu0 0
        %1000 = vmatprep.subr.bf16.mxu0 0
        %1001 = vmatpush1.bf16.xpose.msra.mxu0 0
        %1002 = vmatprep.subr.bf16.mxu0 0
        %1003 = vmatpush1.bf16.xpose.msra.mxu0 0
        %1004 = vmatprep.subr.bf16.mxu0 0
        %1005 = vmatpush1.bf16.xpose.msra.mxu0 0
        %1006 = vmatprep.subr.bf16.mxu0 0
        %1007 = vmatpush1.bf16.xpose.msra.mxu0 0
        %1008 = vmatprep.subr.bf16.mxu0 0
        %1009 = vmatpush1.bf16.xpose.msra.mxu0 0
        %1010 = vmatprep.subr.bf16.mxu0 0
        %1011 = vmatpush1.bf16.xpose.msra.mxu0 0
        %1012 = vmatprep.subr.bf16.mxu0 0
        %1013 = vmatpush1.bf16.xpose.msra.mxu0 0
        %1014 = vmatprep.subr.bf16.mxu0 0
        %1015 = vmatpush1.bf16.xpose.msra.mxu0 0
        %1016 = vmatprep.subr.bf16.mxu0 0
        %1017 = vmatpush1.bf16.xpose.msra.mxu0 0
        %1018 = vmatprep.subr.bf16.mxu0 0
        %1019 = vmatpush1.bf16.xpose.msra.mxu0 0
        %1020 = vmatprep.subr.bf16.mxu0 0
        %1021 = vmatpush1.bf16.xpose.msra.mxu0 0
        %1022 = vmatprep.subr.bf16.mxu0 0
        %1023 = vmatpush1.bf16.xpose.msra.mxu0 0
        %1024 = vmatprep.subr.bf16.mxu0 0
        %1025 = vmatpush1.bf16.xpose.msra.mxu0 0
        %1026 = vmatprep.subr.bf16.mxu0 0
        %1027 = vmatpush1.bf16.xpose.msra.mxu0 0
        %1028 = vmatprep.mubr.bf16.mxu0 0
        %1029 = vmatmul.mubr.bf16.gmra.mrb[0].mxu0 %v991
        %v1030 = vpop.f32.mrb[0].mxu0
        %v1031 = vadd.f32 0.0, %v1030
        %v1032 = vpop.f32.mrb[0].mxu0
        %v1033 = vpop.f32.mrb[0].mxu0
        %v1034 = vadd.f32 0.0, %v1033
        %v1035 = vpop.f32.mrb[0].mxu0
        %1036 = vmatprep.mubr.bf16.mxu0 0
        %1037 = vmatmul.mubr.bf16.gmra.mrb[0].mxu0 %v994
        %v1038 = vpop.f32.mrb[0].mxu0
        %v1039 = vadd.f32 0.0, %v1038
        %v1040 = vpop.f32.mrb[0].mxu0
        %v1041 = vpop.f32.mrb[0].mxu0
        %v1042 = vadd.f32 0.0, %v1041
        %v1043 = vpop.f32.mrb[0].mxu0
        %1044 = vdwg.mxu0
        %v1045 = vsel %vm519, %v1031, -inf
        %1046 = vmax.xlane.f32.xlu0 %v1045
        %v1047 = vpop.xlane.xlu0 %1046
        %v1048 = vsel %vm519, %v1034, -inf
        %1049 = vmax.xlane.f32.xlu0 %v1048
        %v1050 = vpop.xlane.xlu0 %1049
        %v1051 = vsel %vm519, %v1039, -inf
        %1052 = vmax.xlane.f32.xlu0 %v1051
        %v1053 = vpop.xlane.xlu0 %1052
        %v1054 = vsel %vm519, %v1042, -inf
        %1055 = vmax.xlane.f32.xlu0 %v1054
        %v1056 = vpop.xlane.xlu0 %1055
        %v1057 = vsub.f32 %v1031, %v1047
        %v1058 = vsub.f32 %v1034, %v1050
        %v1059 = vsub.f32 %v1039, %v1053
        %v1060 = vsub.f32 %v1042, %v1056
        %v1061 = vmul.f32 %v1057, 1.442695
        %v1062 = vpow.pop %v1061
        %v1063 = vmul.f32 %v1058, 1.442695
        %v1064 = vpow.pop %v1063
        %v1065 = vmul.f32 %v1059, 1.442695
        %v1066 = vpow.pop %v1065
        %v1067 = vmul.f32 %v1060, 1.442695
        %v1068 = vpow.pop %v1067
        %v1069 = vsel %vm519, %v1062, 0.0
        %1070 = vadd.xlane.f32.xlu0 %v1069
        %v1071 = vpop.xlane.xlu0 %1070
        %v1072 = vsel %vm519, %v1064, 0.0
        %1073 = vadd.xlane.f32.xlu0 %v1072
        %v1074 = vpop.xlane.xlu0 %1073
        %v1075 = vsel %vm519, %v1066, 0.0
        %1076 = vadd.xlane.f32.xlu0 %v1075
        %v1077 = vpop.xlane.xlu0 %1076
        %v1078 = vsel %vm519, %v1068, 0.0
        %1079 = vadd.xlane.f32.xlu0 %v1078
        %v1080 = vpop.xlane.xlu0 %1079
        %v1081 = vrcp.pop %v1071
        %v1082 = vrcp.pop %v1074
        %v1083 = vrcp.pop %v1077
        %v1084 = vrcp.pop %v1080
        %v1085 = vmul.f32 %v1062, %v1081
        %v1086 = vmul.f32 %v1064, %v1082
        %v1087 = vmul.f32 %v1066, %v1083
        %v1088 = vmul.f32 %v1068, %v1084
        %s1089 = scalar_lea.vmem %s352, 32 [#allocation11]
        %1090 = vst.msk [vmem:[%s1089] sm:$0xff] %vm519, %v1085
        %1091 = vst.msk [vmem:[%s1089 + $0x8] sm:$0xff] %vm519, %v1086
        %1092 = vst.msk [vmem:[%s1089 + $0x10] sm:$0xff] %vm519, %v1087
        %1093 = vst.msk [vmem:[%s1089 + $0x18] sm:$0xff] %vm519, %v1088
        %v1095 = vsel %vm519, %v1085, 0
        %1097 = vmatprep.subr.mxu0 0.0
        %1098 = vmatpush1.msra.mxu0 %v444
        %1099 = vmatprep.subr.mxu0 0.0
        %1100 = vmatpush1.msra.mxu0 %v447
        %1101 = vmatprep.subr.mxu0 0.0
        %1102 = vmatpush1.msra.mxu0 0.0
        %1103 = vmatprep.subr.mxu0 0.0
        %1104 = vmatpush1.msra.mxu0 0.0
        %1105 = vmatprep.subr.mxu0 0.0
        %1106 = vmatpush1.msra.mxu0 0.0
        %1107 = vmatprep.subr.mxu0 0.0
        %1108 = vmatpush1.msra.mxu0 0.0
        %1109 = vmatprep.subr.mxu0 0.0
        %1110 = vmatpush1.msra.mxu0 0.0
        %1111 = vmatprep.subr.mxu0 0.0
        %1112 = vmatpush1.msra.mxu0 0.0
        %1113 = vmatprep.subr.mxu0 0.0
        %1114 = vmatpush1.msra.mxu0 0.0
        %1115 = vmatprep.subr.mxu0 0.0
        %1116 = vmatpush1.msra.mxu0 0.0
        %1117 = vmatprep.subr.mxu0 0.0
        %1118 = vmatpush1.msra.mxu0 0.0
        %1119 = vmatprep.subr.mxu0 0.0
        %1120 = vmatpush1.msra.mxu0 0.0
        %1121 = vmatprep.subr.mxu0 0.0
        %1122 = vmatpush1.msra.mxu0 0.0
        %1123 = vmatprep.subr.mxu0 0.0
        %1124 = vmatpush1.msra.mxu0 0.0
        %1125 = vmatprep.subr.mxu0 0.0
        %1126 = vmatpush1.msra.mxu0 0.0
        %1127 = vmatprep.subr.mxu0 0.0
        %1128 = vmatpush1.msra.mxu0 0.0
        %1129 = vmatprep.subr.mxu0 0.0
        %1130 = vmatpush1.msra.mxu0 0.0
        %1131 = vmatprep.subr.mxu0 0.0
        %1132 = vmatpush1.msra.mxu0 0.0
        %1133 = vmatprep.subr.mxu0 0.0
        %1134 = vmatpush1.msra.mxu0 0.0
        %1135 = vmatprep.subr.mxu0 0.0
        %1136 = vmatpush1.msra.mxu0 0.0
        %1137 = vmatprep.subr.mxu0 0.0
        %1138 = vmatpush1.msra.mxu0 0.0
        %1139 = vmatprep.subr.mxu0 0.0
        %1140 = vmatpush1.msra.mxu0 0.0
        %1141 = vmatprep.subr.mxu0 0.0
        %1142 = vmatpush1.msra.mxu0 0.0
        %1143 = vmatprep.subr.mxu0 0.0
        %1144 = vmatpush1.msra.mxu0 0.0
        %1145 = vmatprep.subr.mxu0 0.0
        %1146 = vmatpush1.msra.mxu0 0.0
        %1147 = vmatprep.subr.mxu0 0.0
        %1148 = vmatpush1.msra.mxu0 0.0
        %1149 = vmatprep.subr.mxu0 0.0
        %1150 = vmatpush1.msra.mxu0 0.0
        %1151 = vmatprep.subr.mxu0 0.0
        %1152 = vmatpush1.msra.mxu0 0.0
        %1153 = vmatprep.subr.mxu0 0.0
        %1154 = vmatpush1.msra.mxu0 0.0
        %1155 = vmatprep.subr.mxu0 0.0
        %1156 = vmatpush1.msra.mxu0 0.0
        %1157 = vmatprep.subr.mxu0 0.0
        %1158 = vmatpush1.msra.mxu0 0.0
        %1159 = vmatprep.subr.mxu0 0.0
        %1160 = vmatpush1.msra.mxu0 0.0
        %1161 = vmatprep.mubr.f32.mxu0 0.0
        %1162 = vmatmul.mubr.f32.gmra.mrb[0].mxu0 %v1095
        %v1163 = vpop.f32.mrb[0].mxu0
        %v1164 = vadd.f32 0.0, %v1163
        %v1165 = vpop.f32.mrb[0].mxu0
        %1166 = vdwg.mxu0
        %1169 = vrot.lane.b32.xlu0 %v444, 120
        %v1170 = vpop.permute.xlu0 %1169
        %1171 = vrot.lane.b32.xlu0 %v447, 120
        %v1172 = vpop.permute.xlu0 %1171
        %v1176 = vsel %vm519, %v1086, 0
        %1178 = vmatprep.subr.mxu0 0.0
        %1179 = vmatpush1.msra.mxu0 %v1170
        %1180 = vmatprep.subr.mxu0 0.0
        %1181 = vmatpush1.msra.mxu0 %v1172
        %1182 = vmatprep.subr.mxu0 0.0
        %1183 = vmatpush1.msra.mxu0 0.0
        %1184 = vmatprep.subr.mxu0 0.0
        %1185 = vmatpush1.msra.mxu0 0.0
        %1186 = vmatprep.subr.mxu0 0.0
        %1187 = vmatpush1.msra.mxu0 0.0
        %1188 = vmatprep.subr.mxu0 0.0
        %1189 = vmatpush1.msra.mxu0 0.0
        %1190 = vmatprep.subr.mxu0 0.0
        %1191 = vmatpush1.msra.mxu0 0.0
        %1192 = vmatprep.subr.mxu0 0.0
        %1193 = vmatpush1.msra.mxu0 0.0
        %1194 = vmatprep.subr.mxu0 0.0
        %1195 = vmatpush1.msra.mxu0 0.0
        %1196 = vmatprep.subr.mxu0 0.0
        %1197 = vmatpush1.msra.mxu0 0.0
        %1198 = vmatprep.subr.mxu0 0.0
        %1199 = vmatpush1.msra.mxu0 0.0
        %1200 = vmatprep.subr.mxu0 0.0
        %1201 = vmatpush1.msra.mxu0 0.0
        %1202 = vmatprep.subr.mxu0 0.0
        %1203 = vmatpush1.msra.mxu0 0.0
        %1204 = vmatprep.subr.mxu0 0.0
        %1205 = vmatpush1.msra.mxu0 0.0
        %1206 = vmatprep.subr.mxu0 0.0
        %1207 = vmatpush1.msra.mxu0 0.0
        %1208 = vmatprep.subr.mxu0 0.0
        %1209 = vmatpush1.msra.mxu0 0.0
        %1210 = vmatprep.subr.mxu0 0.0
        %1211 = vmatpush1.msra.mxu0 0.0
        %1212 = vmatprep.subr.mxu0 0.0
        %1213 = vmatpush1.msra.mxu0 0.0
        %1214 = vmatprep.subr.mxu0 0.0
        %1215 = vmatpush1.msra.mxu0 0.0
        %1216 = vmatprep.subr.mxu0 0.0
        %1217 = vmatpush1.msra.mxu0 0.0
        %1218 = vmatprep.subr.mxu0 0.0
        %1219 = vmatpush1.msra.mxu0 0.0
        %1220 = vmatprep.subr.mxu0 0.0
        %1221 = vmatpush1.msra.mxu0 0.0
        %1222 = vmatprep.subr.mxu0 0.0
        %1223 = vmatpush1.msra.mxu0 0.0
        %1224 = vmatprep.subr.mxu0 0.0
        %1225 = vmatpush1.msra.mxu0 0.0
        %1226 = vmatprep.subr.mxu0 0.0
        %1227 = vmatpush1.msra.mxu0 0.0
        %1228 = vmatprep.subr.mxu0 0.0
        %1229 = vmatpush1.msra.mxu0 0.0
        %1230 = vmatprep.subr.mxu0 0.0
        %1231 = vmatpush1.msra.mxu0 0.0
        %1232 = vmatprep.subr.mxu0 0.0
        %1233 = vmatpush1.msra.mxu0 0.0
        %1234 = vmatprep.subr.mxu0 0.0
        %1235 = vmatpush1.msra.mxu0 0.0
        %1236 = vmatprep.subr.mxu0 0.0
        %1237 = vmatpush1.msra.mxu0 0.0
        %1238 = vmatprep.subr.mxu0 0.0
        %1239 = vmatpush1.msra.mxu0 0.0
        %1240 = vmatprep.subr.mxu0 0.0
        %1241 = vmatpush1.msra.mxu0 0.0
        %1242 = vmatprep.mubr.f32.mxu0 0.0
        %1243 = vmatmul.mubr.f32.gmra.mrb[0].mxu0 %v1176
        %v1244 = vpop.f32.mrb[0].mxu0
        %v1245 = vadd.f32 0.0, %v1244
        %v1246 = vpop.f32.mrb[0].mxu0
        %1247 = vdwg.mxu0
        %1248 = vrot.lane.b32.xlu0 %v444, 112
        %v1249 = vpop.permute.xlu0 %1248
        %1250 = vrot.lane.b32.xlu0 %v447, 112
        %v1251 = vpop.permute.xlu0 %1250
        %v1255 = vsel %vm519, %v1087, 0
        %1257 = vmatprep.subr.mxu0 0.0
        %1258 = vmatpush1.msra.mxu0 %v1249
        %1259 = vmatprep.subr.mxu0 0.0
        %1260 = vmatpush1.msra.mxu0 %v1251
        %1261 = vmatprep.subr.mxu0 0.0
        %1262 = vmatpush1.msra.mxu0 0.0
        %1263 = vmatprep.subr.mxu0 0.0
        %1264 = vmatpush1.msra.mxu0 0.0
        %1265 = vmatprep.subr.mxu0 0.0
        %1266 = vmatpush1.msra.mxu0 0.0
        %1267 = vmatprep.subr.mxu0 0.0
        %1268 = vmatpush1.msra.mxu0 0.0
        %1269 = vmatprep.subr.mxu0 0.0
        %1270 = vmatpush1.msra.mxu0 0.0
        %1271 = vmatprep.subr.mxu0 0.0
        %1272 = vmatpush1.msra.mxu0 0.0
        %1273 = vmatprep.subr.mxu0 0.0
        %1274 = vmatpush1.msra.mxu0 0.0
        %1275 = vmatprep.subr.mxu0 0.0
        %1276 = vmatpush1.msra.mxu0 0.0
        %1277 = vmatprep.subr.mxu0 0.0
        %1278 = vmatpush1.msra.mxu0 0.0
        %1279 = vmatprep.subr.mxu0 0.0
        %1280 = vmatpush1.msra.mxu0 0.0
        %1281 = vmatprep.subr.mxu0 0.0
        %1282 = vmatpush1.msra.mxu0 0.0
        %1283 = vmatprep.subr.mxu0 0.0
        %1284 = vmatpush1.msra.mxu0 0.0
        %1285 = vmatprep.subr.mxu0 0.0
        %1286 = vmatpush1.msra.mxu0 0.0
        %1287 = vmatprep.subr.mxu0 0.0
        %1288 = vmatpush1.msra.mxu0 0.0
        %1289 = vmatprep.subr.mxu0 0.0
        %1290 = vmatpush1.msra.mxu0 0.0
        %1291 = vmatprep.subr.mxu0 0.0
        %1292 = vmatpush1.msra.mxu0 0.0
        %1293 = vmatprep.subr.mxu0 0.0
        %1294 = vmatpush1.msra.mxu0 0.0
        %1295 = vmatprep.subr.mxu0 0.0
        %1296 = vmatpush1.msra.mxu0 0.0
        %1297 = vmatprep.subr.mxu0 0.0
        %1298 = vmatpush1.msra.mxu0 0.0
        %1299 = vmatprep.subr.mxu0 0.0
        %1300 = vmatpush1.msra.mxu0 0.0
        %1301 = vmatprep.subr.mxu0 0.0
        %1302 = vmatpush1.msra.mxu0 0.0
        %1303 = vmatprep.subr.mxu0 0.0
        %1304 = vmatpush1.msra.mxu0 0.0
        %1305 = vmatprep.subr.mxu0 0.0
        %1306 = vmatpush1.msra.mxu0 0.0
        %1307 = vmatprep.subr.mxu0 0.0
        %1308 = vmatpush1.msra.mxu0 0.0
        %1309 = vmatprep.subr.mxu0 0.0
        %1310 = vmatpush1.msra.mxu0 0.0
        %1311 = vmatprep.subr.mxu0 0.0
        %1312 = vmatpush1.msra.mxu0 0.0
        %1313 = vmatprep.subr.mxu0 0.0
        %1314 = vmatpush1.msra.mxu0 0.0
        %1315 = vmatprep.subr.mxu0 0.0
        %1316 = vmatpush1.msra.mxu0 0.0
        %1317 = vmatprep.subr.mxu0 0.0
        %1318 = vmatpush1.msra.mxu0 0.0
        %1319 = vmatprep.subr.mxu0 0.0
        %1320 = vmatpush1.msra.mxu0 0.0
        %1321 = vmatprep.mubr.f32.mxu0 0.0
        %1322 = vmatmul.mubr.f32.gmra.mrb[0].mxu0 %v1255
        %v1323 = vpop.f32.mrb[0].mxu0
        %v1324 = vadd.f32 0.0, %v1323
        %v1325 = vpop.f32.mrb[0].mxu0
        %1326 = vdwg.mxu0
        %1327 = vrot.lane.b32.xlu0 %v444, 104
        %v1328 = vpop.permute.xlu0 %1327
        %1329 = vrot.lane.b32.xlu0 %v447, 104
        %v1330 = vpop.permute.xlu0 %1329
        %v1334 = vsel %vm519, %v1088, 0
        %1336 = vmatprep.subr.mxu0 0.0
        %1337 = vmatpush1.msra.mxu0 %v1328
        %1338 = vmatprep.subr.mxu0 0.0
        %1339 = vmatpush1.msra.mxu0 %v1330
        %1340 = vmatprep.subr.mxu0 0.0
        %1341 = vmatpush1.msra.mxu0 0.0
        %1342 = vmatprep.subr.mxu0 0.0
        %1343 = vmatpush1.msra.mxu0 0.0
        %1344 = vmatprep.subr.mxu0 0.0
        %1345 = vmatpush1.msra.mxu0 0.0
        %1346 = vmatprep.subr.mxu0 0.0
        %1347 = vmatpush1.msra.mxu0 0.0
        %1348 = vmatprep.subr.mxu0 0.0
        %1349 = vmatpush1.msra.mxu0 0.0
        %1350 = vmatprep.subr.mxu0 0.0
        %1351 = vmatpush1.msra.mxu0 0.0
        %1352 = vmatprep.subr.mxu0 0.0
        %1353 = vmatpush1.msra.mxu0 0.0
        %1354 = vmatprep.subr.mxu0 0.0
        %1355 = vmatpush1.msra.mxu0 0.0
        %1356 = vmatprep.subr.mxu0 0.0
        %1357 = vmatpush1.msra.mxu0 0.0
        %1358 = vmatprep.subr.mxu0 0.0
        %1359 = vmatpush1.msra.mxu0 0.0
        %1360 = vmatprep.subr.mxu0 0.0
        %1361 = vmatpush1.msra.mxu0 0.0
        %1362 = vmatprep.subr.mxu0 0.0
        %1363 = vmatpush1.msra.mxu0 0.0
        %1364 = vmatprep.subr.mxu0 0.0
        %1365 = vmatpush1.msra.mxu0 0.0
        %1366 = vmatprep.subr.mxu0 0.0
        %1367 = vmatpush1.msra.mxu0 0.0
        %1368 = vmatprep.subr.mxu0 0.0
        %1369 = vmatpush1.msra.mxu0 0.0
        %1370 = vmatprep.subr.mxu0 0.0
        %1371 = vmatpush1.msra.mxu0 0.0
        %1372 = vmatprep.subr.mxu0 0.0
        %1373 = vmatpush1.msra.mxu0 0.0
        %1374 = vmatprep.subr.mxu0 0.0
        %1375 = vmatpush1.msra.mxu0 0.0
        %1376 = vmatprep.subr.mxu0 0.0
        %1377 = vmatpush1.msra.mxu0 0.0
        %1378 = vmatprep.subr.mxu0 0.0
        %1379 = vmatpush1.msra.mxu0 0.0
        %1380 = vmatprep.subr.mxu0 0.0
        %1381 = vmatpush1.msra.mxu0 0.0
        %1382 = vmatprep.subr.mxu0 0.0
        %1383 = vmatpush1.msra.mxu0 0.0
        %1384 = vmatprep.subr.mxu0 0.0
        %1385 = vmatpush1.msra.mxu0 0.0
        %1386 = vmatprep.subr.mxu0 0.0
        %1387 = vmatpush1.msra.mxu0 0.0
        %1388 = vmatprep.subr.mxu0 0.0
        %1389 = vmatpush1.msra.mxu0 0.0
        %1390 = vmatprep.subr.mxu0 0.0
        %1391 = vmatpush1.msra.mxu0 0.0
        %1392 = vmatprep.subr.mxu0 0.0
        %1393 = vmatpush1.msra.mxu0 0.0
        %1394 = vmatprep.subr.mxu0 0.0
        %1395 = vmatpush1.msra.mxu0 0.0
        %1396 = vmatprep.subr.mxu0 0.0
        %1397 = vmatpush1.msra.mxu0 0.0
        %1398 = vmatprep.subr.mxu0 0.0
        %1399 = vmatpush1.msra.mxu0 0.0
        %1400 = vmatprep.mubr.f32.mxu0 0.0
        %1401 = vmatmul.mubr.f32.gmra.mrb[0].mxu0 %v1334
        %v1402 = vpop.f32.mrb[0].mxu0
        %v1403 = vadd.f32 0.0, %v1402
        %v1404 = vpop.f32.mrb[0].mxu0
        %1405 = vdwg.mxu0
        %1407 = vrot.lane.b32.xlu0 %v1245, 8
        %v1408 = vpop.permute.xlu0 %1407
        %1411 = vrot.lane.b32.xlu0 %v1324, 16
        %v1412 = vpop.permute.xlu0 %1411
        %1415 = vrot.lane.b32.xlu0 %v1403, 24
        %v1416 = vpop.permute.xlu0 %1415
        %v1418 = vsel %vm892, %v1164, %v1408
        %v1419 = vsel %vm519, %v1418, %v1412
        %v1420 = vsel %vm895, %v1419, %v1416
        %v1421 = vld [vmem:[#allocation8] sm:$0xff]
        %v1422 = vld [vmem:[#allocation8 + $0x8] sm:$0xff]
        %v1423 = vld [vmem:[#allocation8 + $0x10] sm:$0xff]
        %v1424 = vld [vmem:[#allocation8 + $0x18] sm:$0xff]
        %v1425 = vld [vmem:[%s5] sm:$0xff]
        %v1427 = vsel %vm394, %v1420, 0
        %1429 = vmatprep.subr.mxu0 0.0
        %1430 = vmatpush1.msra.mxu0 %v1421
        %1431 = vmatprep.subr.mxu0 0.0
        %1432 = vmatpush1.msra.mxu0 %v1422
        %1433 = vmatprep.subr.mxu0 0.0
        %1434 = vmatpush1.msra.mxu0 %v1423
        %1435 = vmatprep.subr.mxu0 0.0
        %1436 = vmatpush1.msra.mxu0 %v1424
        %1437 = vmatprep.subr.mxu0 0.0
        %1438 = vmatpush1.msra.mxu0 0.0
        %1439 = vmatprep.subr.mxu0 0.0
        %1440 = vmatpush1.msra.mxu0 0.0
        %1441 = vmatprep.subr.mxu0 0.0
        %1442 = vmatpush1.msra.mxu0 0.0
        %1443 = vmatprep.subr.mxu0 0.0
        %1444 = vmatpush1.msra.mxu0 0.0
        %1445 = vmatprep.subr.mxu0 0.0
        %1446 = vmatpush1.msra.mxu0 0.0
        %1447 = vmatprep.subr.mxu0 0.0
        %1448 = vmatpush1.msra.mxu0 0.0
        %1449 = vmatprep.subr.mxu0 0.0
        %1450 = vmatpush1.msra.mxu0 0.0
        %1451 = vmatprep.subr.mxu0 0.0
        %1452 = vmatpush1.msra.mxu0 0.0
        %1453 = vmatprep.subr.mxu0 0.0
        %1454 = vmatpush1.msra.mxu0 0.0
        %1455 = vmatprep.subr.mxu0 0.0
        %1456 = vmatpush1.msra.mxu0 0.0
        %1457 = vmatprep.subr.mxu0 0.0
        %1458 = vmatpush1.msra.mxu0 0.0
        %1459 = vmatprep.subr.mxu0 0.0
        %1460 = vmatpush1.msra.mxu0 0.0
        %1461 = vmatprep.subr.mxu0 0.0
        %1462 = vmatpush1.msra.mxu0 0.0
        %1463 = vmatprep.subr.mxu0 0.0
        %1464 = vmatpush1.msra.mxu0 0.0
        %1465 = vmatprep.subr.mxu0 0.0
        %1466 = vmatpush1.msra.mxu0 0.0
        %1467 = vmatprep.subr.mxu0 0.0
        %1468 = vmatpush1.msra.mxu0 0.0
        %1469 = vmatprep.subr.mxu0 0.0
        %1470 = vmatpush1.msra.mxu0 0.0
        %1471 = vmatprep.subr.mxu0 0.0
        %1472 = vmatpush1.msra.mxu0 0.0
        %1473 = vmatprep.subr.mxu0 0.0
        %1474 = vmatpush1.msra.mxu0 0.0
        %1475 = vmatprep.subr.mxu0 0.0
        %1476 = vmatpush1.msra.mxu0 0.0
        %1477 = vmatprep.subr.mxu0 0.0
        %1478 = vmatpush1.msra.mxu0 0.0
        %1479 = vmatprep.subr.mxu0 0.0
        %1480 = vmatpush1.msra.mxu0 0.0
        %1481 = vmatprep.subr.mxu0 0.0
        %1482 = vmatpush1.msra.mxu0 0.0
        %1483 = vmatprep.subr.mxu0 0.0
        %1484 = vmatpush1.msra.mxu0 0.0
        %1485 = vmatprep.subr.mxu0 0.0
        %1486 = vmatpush1.msra.mxu0 0.0
        %1487 = vmatprep.subr.mxu0 0.0
        %1488 = vmatpush1.msra.mxu0 0.0
        %1489 = vmatprep.subr.mxu0 0.0
        %1490 = vmatpush1.msra.mxu0 0.0
        %1491 = vmatprep.subr.mxu0 0.0
        %1492 = vmatpush1.msra.mxu0 0.0
        %1493 = vmatprep.mubr.f32.mxu0 0.0
        %1494 = vmatmul.mubr.f32.gmra.mrb[0].mxu0 %v1427
        %v1495 = vpop.f32.mrb[0].mxu0
        %v1496 = vadd.f32 %v1425, %v1495
        %v1497 = vpop.f32.mrb[0].mxu0
        %1498 = vdwg.mxu0
        %s1499 = scalar_lea.vmem %s345, 8 [#allocation10]
        %1500 = vst.msk [vmem:[%s1499] sm:$0xff] %vm394, %v1496
        %s1501 = sand.u32 %s169, 1
        %s1502 = scalar_lea.sflag [#allocation4], %s1501
        %s1503 = sand.u32 %s169, 1
        %s1504 = smul.addr %s1503, 16
        %s1505 = scalar_lea.vmem [#allocation10], %s1504
        %s1506 = sand.u32 %s195, 1
        %s1507 = scalar_lea.sflag [#allocation12], %s1506
        %s1508 = sand.u32 %s195, 1
        %s1509 = smul.addr %s1508, 64
        %s1510 = scalar_lea.vmem [#allocation11], %s1509
        // Predicated region
        $region61: #{tpu_custom_call.1} parent=43 // pred_check
          %p1511 = pneg %p179
        $region62: #{tpu_custom_call.1} parent=43 // pred_check_branch
          %1513 = sbr.rel (%p1511) target = $region64
        $region63: #{tpu_custom_call.1} parent=43 // pred_region
          %s1514 = smul.u32 2, %s30
          %s1516 = ssub.s32 256, 256
          %1517 = vsyncadd %s1502, %s1516
          %s1518 = smul.addr %s1514, 128
          %s1519 = scalar_lea.hbm %s6, %s1518
          %s1520 = sshll.u32 %s1505, 4
          %s1521 = int_to_ptr.vmem [resolvable:$true] %s1520
          %1526 = dma.vmem_to_hbm [thread:$0]  %s1521, 256, %s1519, %s1502, 128, 128, 8
        $region64: #{tpu_custom_call.1} parent=43 // pred_fallthru
          _
        // Predicated region
        $region65: #{tpu_custom_call.1} parent=43 // pred_check
          %p1527 = pneg %p205
        $region66: #{tpu_custom_call.1} parent=43 // pred_check_branch
          %1529 = sbr.rel (%p1527) target = $region68
        $region67: #{tpu_custom_call.1} parent=43 // pred_region
          %s1530 = smul.u32 2, %s30
          %s1532 = ssub.s32 1024, 1024
          %1533 = vsyncadd %s1507, %s1532
          %s1534 = smul.addr %s1530, 4
          %s1535 = smul.addr %s1534, 128
          %s1536 = scalar_lea.hbm %s7, %s1535
          %s1537 = sshll.u32 %s1510, 4
          %s1538 = int_to_ptr.vmem [resolvable:$true] %s1537
          %1543 = dma.vmem_to_hbm [thread:$0]  %s1538, 1024, %s1536, %s1507, 128, 128, 8
        $region68: #{tpu_custom_call.1} parent=43 // pred_fallthru
          _
      $region44: #{tpu_custom_call.1} parent=5 // pred_fallthru
        _
      %p1544 = scmp.le.s32.totalorder 2, %s25
      // Predicated region
      $region69: #{tpu_custom_call.1} parent=5 // pred_check
        %p1545 = pneg %p1544
      $region70: #{tpu_custom_call.1} parent=5 // pred_check_branch
        %1547 = sbr.rel (%p1545) target = $region72
      $region71: #{tpu_custom_call.1} parent=5 // pred_region
        %s1548 = ssub.s32 %s25, 2
        // Predicated region
        $region73: #{tpu_custom_call.1} parent=71 // pred_check
          %p1549 = pneg %p185
        $region74: #{tpu_custom_call.1} parent=71 // pred_check_branch
          %1551 = sbr.rel (%p1549) target = $region76
        $region75: #{tpu_custom_call.1} parent=71 // pred_region
          %s1552 = sand.u32 %s170, 1
          %s1553 = scalar_lea.sflag [#allocation4], %s1552
          %s1554 = sand.u32 %s170, 1
          %s1555 = smul.addr %s1554, 16
          %s1556 = scalar_lea.vmem [#allocation10], %s1555
          %1557 = dma.done %s1553, 256
        $region76: #{tpu_custom_call.1} parent=71 // pred_fallthru
          _
        // Predicated region
        $region77: #{tpu_custom_call.1} parent=71 // pred_check
          %p1558 = pneg %p211
        $region78: #{tpu_custom_call.1} parent=71 // pred_check_branch
          %1560 = sbr.rel (%p1558) target = $region80
        $region79: #{tpu_custom_call.1} parent=71 // pred_region
          %s1561 = sand.u32 %s196, 1
          %s1562 = scalar_lea.sflag [#allocation12], %s1561
          %s1563 = sand.u32 %s196, 1
          %s1564 = smul.addr %s1563, 64
          %s1565 = scalar_lea.vmem [#allocation11], %s1564
          %1566 = dma.done %s1562, 1024
        $region80: #{tpu_custom_call.1} parent=71 // pred_fallthru
          _
      $region72: #{tpu_custom_call.1} parent=5 // pred_fallthru
        _
    $region6: #{tpu_custom_call.1} parent=1 // loop_footer
      %s29 = sadd.s32 1, %s25
    $region7: #{tpu_custom_call.1} parent=1 // loop_footer_branch
      %24 = sbr.rel target = $region3
    $region8: #{tpu_custom_call.1} parent=1 // loop_exit
      _
    %1567 = vsyncpa [#allocation3], 1
    %s1568 = scalar_lea.sflag [#allocation3], 1
    %1569 = vsyncpa %s1568, 1
    %1570 = vsyncpa [#allocation6], 1
    %1571 = vsyncpa [#allocation9], 1
    %1572 = vsyncpa [#allocation4], 1
    %s1573 = scalar_lea.sflag [#allocation4], 1
    %1574 = vsyncpa %s1573, 1
    %1575 = vsyncpa [#allocation12], 1
    %s1576 = scalar_lea.sflag [#allocation12], 1
    %1577 = vsyncpa %s1576, 1

</llo_original>
